<compile_context>
chip_gen: v7x
topology: tpu7x:2x2x1
jax: 0.10.0
libtpu: 0.0.40
codegen_flags: <defaults>
</compile_context>

<pallas_src>
import math

import jax
import jax.numpy as jnp
from jax.experimental import pallas as pl
from jax.experimental.pallas import tpu as pltpu


def _nonlocal_kernel(x_ref, wqkv_ref, bqkv_ref, wo_ref, bo_ref, o_ref):
    C = wo_ref.shape[0]
    cdt = x_ref.dtype                              # MXU compute dtype
    w_qkv = wqkv_ref[...]                          # (3C, C)
    b_qkv = bqkv_ref[...].astype(jnp.float32)      # (3C, 1) -> broadcasts over HW
    w_o = wo_ref[...]                              # (C, C)
    b_o = bo_ref[...].astype(jnp.float32)          # (C, 1)

    for b in range(x_ref.shape[0]):                # static unroll over batch block
        x = x_ref[b]                               # (C, HW), input dtype

        # Fused theta/phi/g projection: one (3C, C) @ (C, HW) MXU matmul.
        proj = jnp.dot(w_qkv, x, preferred_element_type=jnp.float32) + b_qkv
        theta = proj[0 * C:1 * C].astype(cdt)      # (C, HW_q)
        phi = proj[1 * C:2 * C].astype(cdt)        # (C, HW_k)
        g = proj[2 * C:3 * C].astype(cdt)          # (C, HW_k)

        # scores[j, i] = sum_c phi[c, j] * theta[c, i]  -> (HW_k, HW_q).
        # Key-major layout keeps the second big matmul in native (M,K)@(K,N)
        # form (no (HW, HW) transposed operand).
        scores = jax.lax.dot_general(
            phi, theta, (((0,), (0,)), ((), ())),
            preferred_element_type=jnp.float32)

        # Softmax over keys (axis 0); normalization deferred past the matmul.
        m = jnp.max(scores, axis=0, keepdims=True)       # (1, HW_q)
        e = jnp.exp(scores - m)                          # (HW_k, HW_q), f32
        denom = jnp.sum(e, axis=0, keepdims=True)        # (1, HW_q)

        # Un-normalized output: (C, HW_k) @ (HW_k, HW_q) -> (C, HW_q).
        out_un = jnp.dot(g, e.astype(cdt), preferred_element_type=jnp.float32)
        # HW reciprocals instead of HW^2 divides (approx=True would move this
        # to the EUP; kept exact here so the tight numerical check is safe).
        out_cf = out_un * pl.reciprocal(denom)

        # Output 1x1 conv + residual (re-read x_ref: no long-lived f32 copy).
        y = (jnp.dot(w_o, out_cf.astype(cdt), preferred_element_type=jnp.float32)
             + b_o + x_ref[b].astype(jnp.float32))
        o_ref[b] = y.astype(o_ref.dtype)


def nonlocal_block(x, wt, bt, wp, bp, wg, bg, wo, bo, *, block_b=None,
                   interpret=False):
    """NonLocalBlock forward. x: (B, C, H, W) NCHW; weights (C, C); biases (C,)."""
    B, C, H, W = x.shape
    HW = H * W
    # NCHW flattened to channels-first pixel matrices -- a free reshape; every
    # big intermediate is lane-dense along HW.
    x_cf = x.reshape(B, C, HW)

    # Fuse the three projection weights/biases into single operands.
    w_qkv = jnp.concatenate([wt, wp, wg], axis=0)                 # (3C, C)
    b_qkv = jnp.concatenate([bt, bp, bg], axis=0).reshape(3 * C, 1)
    bo2 = bo.reshape(C, 1)

    # Rough per-batch-item f32 working set: scores + exp + projections/output.
    per_item = 4 * (2 * HW * HW + 6 * C * HW)
    if block_b is None:
        budget = 16 << 20          # stay well inside every chip's scoped VMEM
        block_b = max(1, min(B, 8, budget // max(per_item, 1)))
        while B % block_b:
            block_b -= 1
    nsteps = B // block_b

    x_spec = pl.BlockSpec((block_b, C, HW), lambda b: (b, 0, 0))

    itemsize = jnp.dtype(x.dtype).itemsize
    cost = pl.CostEstimate(
        flops=2 * B * (4 * C * C * HW + 2 * C * HW * HW),
        transcendentals=B * HW * HW,
        bytes_accessed=(2 * B * C * HW + 4 * C * C + 4 * C) * itemsize,
    )

    # Raise the scoped-VMEM limit only when the working set actually needs it
    # (large HW on v5e's 16 MiB default); leave headroom below physical VMEM.
    need = block_b * per_item + 4 * (4 * C * C + 4 * C)
    vmem_limit = min(int(2 * need), 100 << 20) if need > (16 << 20) else None

    out = pl.pallas_call(
        _nonlocal_kernel,
        out_shape=jax.ShapeDtypeStruct((B, C, HW), x.dtype),
        grid=(nsteps,),
        in_specs=[x_spec,
                  pl.BlockSpec((3 * C, C), lambda b: (0, 0)),
                  pl.BlockSpec((3 * C, 1), lambda b: (0, 0)),
                  pl.BlockSpec((C, C), lambda b: (0, 0)),
                  pl.BlockSpec((C, 1), lambda b: (0, 0))],
        out_specs=x_spec,
        cost_estimate=cost,
        compiler_params=pltpu.CompilerParams(
            dimension_semantics=("parallel",),
            vmem_limit_bytes=vmem_limit),
        interpret=interpret,
    )(x_cf, w_qkv, b_qkv, wo, bo2)
    return out.reshape(B, C, H, W)


def nonlocal_ref(x, wt, bt, wp, bp, wg, bg, wo, bo):
    """Pure-JAX reference matching the PyTorch module."""
    B, C, H, W = x.shape
    xf = x.reshape(B, C, H * W)
    theta = jnp.einsum('oc,bci->boi', wt, xf) + bt[None, :, None]
    phi = jnp.einsum('oc,bci->boi', wp, xf) + bp[None, :, None]
    g = jnp.einsum('oc,bci->boi', wg, xf) + bg[None, :, None]
    scores = jnp.einsum('bci,bcj->bij', theta, phi)
    attn = jax.nn.softmax(scores, axis=-1)
    out = jnp.einsum('bij,bcj->bci', attn, g)
    y = jnp.einsum('oc,bci->boi', wo, out) + bo[None, :, None] + xf
    return y.reshape(B, C, H, W)


if __name__ == "__main__":
    key = jax.random.PRNGKey(0)
    B, C, H, W = 2, 4, 16, 16
    keys = jax.random.split(key, 9)

    x = jax.random.normal(keys[0], (B, C, H, W), dtype=jnp.float32)

    bound = 1.0 / math.sqrt(C)   # PyTorch conv default init range

    def u(k, shape):
        return jax.random.uniform(k, shape, jnp.float32, -bound, bound)

    wt, bt = u(keys[1], (C, C)), u(keys[2], (C,))
    wp, bp = u(keys[3], (C, C)), u(keys[4], (C,))
    wg, bg = u(keys[5], (C, C)), u(keys[6], (C,))
    wo, bo = u(keys[7], (C, C)), u(keys[8], (C,))

    y = jax.block_until_ready(nonlocal_block(x, wt, bt, wp, bp, wg, bg, wo, bo))

    ref = nonlocal_ref(x, wt, bt, wp, bp, wg, bg, wo, bo)
    assert y.shape == x.shape and y.dtype == x.dtype
    max_err = float(jnp.max(jnp.abs(y - ref)))
    assert jnp.allclose(y, ref, atol=2e-3, rtol=2e-3), f"mismatch, max_err={max_err}"

    print("KERNEL_OK")
</pallas_src>

<mosaic_0001>
module attributes {stable_mosaic.version = 11 : i64} {
  func.func @_nonlocal_kernel(%arg0: i32, %arg1: memref<2x4x256xf32, #tpu.memory_space<vmem>>, %arg2: memref<12x4xf32, #tpu.memory_space<vmem>>, %arg3: memref<12x1xf32, #tpu.memory_space<vmem>>, %arg4: memref<4x4xf32, #tpu.memory_space<vmem>>, %arg5: memref<4x1xf32, #tpu.memory_space<vmem>>, %arg6: memref<2x4x256xf32, #tpu.memory_space<vmem>>) attributes {dimension_semantics = [#tpu.dimension_semantics<parallel>], iteration_bounds = array<i64: 1>, scalar_prefetch = 0 : i64, scratch_operands = 0 : i64, tpu.core_type = #tpu.core_type<tc>, window_params = [{transform_indices = @transform_0, window_bounds = array<i64: 2, 4, 256>}, {pipeline_mode = #tpu.pipeline_mode<synchronous>, transform_indices = @transform_1, window_bounds = array<i64: 12, 4>}, {pipeline_mode = #tpu.pipeline_mode<synchronous>, transform_indices = @transform_2, window_bounds = array<i64: 12, 1>}, {pipeline_mode = #tpu.pipeline_mode<synchronous>, transform_indices = @transform_3, window_bounds = array<i64: 4, 4>}, {pipeline_mode = #tpu.pipeline_mode<synchronous>, transform_indices = @transform_4, window_bounds = array<i64: 4, 1>}, {transform_indices = @transform_5, window_bounds = array<i64: 2, 4, 256>}]} {
    %c0 = arith.constant 0 : index
    %c0_0 = arith.constant 0 : index
    %0 = vector.load %arg2[%c0, %c0_0] : memref<12x4xf32, #tpu.memory_space<vmem>>, vector<12x4xf32>
    %c0_1 = arith.constant 0 : index
    %c0_2 = arith.constant 0 : index
    %1 = vector.load %arg3[%c0_1, %c0_2] : memref<12x1xf32, #tpu.memory_space<vmem>>, vector<12x1xf32>
    %c0_3 = arith.constant 0 : index
    %c0_4 = arith.constant 0 : index
    %2 = vector.load %arg4[%c0_3, %c0_4] : memref<4x4xf32, #tpu.memory_space<vmem>>, vector<4x4xf32>
    %c0_5 = arith.constant 0 : index
    %c0_6 = arith.constant 0 : index
    %3 = vector.load %arg5[%c0_5, %c0_6] : memref<4x1xf32, #tpu.memory_space<vmem>>, vector<4x1xf32>
    %c0_7 = arith.constant 0 : index
    %c0_8 = arith.constant 0 : index
    %c0_9 = arith.constant 0 : index
    %4 = vector.load %arg1[%c0_7, %c0_8, %c0_9] : memref<2x4x256xf32, #tpu.memory_space<vmem>>, vector<1x4x256xf32>
    %5 = vector.shape_cast %4 : vector<1x4x256xf32> to vector<4x256xf32>
    %cst = arith.constant dense<0.000000e+00> : vector<12x256xf32>
    %6 = tpu.matmul %0, %5, %cst {dimension_numbers = #tpu.dot_dimension_numbers<[1], [0], [0], [1], [0, 0, 1, 1], [], []>} : vector<12x4xf32>, vector<4x256xf32>, vector<12x256xf32> -> vector<12x256xf32>
    %7 = vector.broadcast %1 : vector<12x1xf32> to vector<12x256xf32>
    %8 = arith.addf %6, %7 : vector<12x256xf32>
    %9 = vector.extract_strided_slice %8 {offsets = [0, 0], sizes = [4, 256], strides = [1, 1]} : vector<12x256xf32> to vector<4x256xf32>
    %10 = vector.extract_strided_slice %8 {offsets = [4, 0], sizes = [4, 256], strides = [1, 1]} : vector<12x256xf32> to vector<4x256xf32>
    %11 = vector.extract_strided_slice %8 {offsets = [8, 0], sizes = [4, 256], strides = [1, 1]} : vector<12x256xf32> to vector<4x256xf32>
    %cst_10 = arith.constant dense<0.000000e+00> : vector<256x256xf32>
    %12 = tpu.matmul %10, %9, %cst_10 {dimension_numbers = #tpu.dot_dimension_numbers<[0], [0], [1], [1], [0, 1, 1, 1], [], []>} : vector<4x256xf32>, vector<4x256xf32>, vector<256x256xf32> -> vector<256x256xf32>
    %cst_11 = arith.constant dense<0xFF800000> : vector<256xf32>
    %13 = vector.multi_reduction <maximumf>, %12, %cst_11 [0] : vector<256x256xf32> to vector<256xf32>
    %14 = vector.shape_cast %13 : vector<256xf32> to vector<1x256xf32>
    %15 = vector.broadcast %14 : vector<1x256xf32> to vector<256x256xf32>
    %16 = arith.subf %12, %15 : vector<256x256xf32>
    %17 = math.exp %16 : vector<256x256xf32>
    %cst_12 = arith.constant dense<0.000000e+00> : vector<256xf32>
    %18 = vector.multi_reduction <add>, %17, %cst_12 [0] : vector<256x256xf32> to vector<256xf32>
    %19 = vector.shape_cast %18 : vector<256xf32> to vector<1x256xf32>
    %cst_13 = arith.constant dense<0.000000e+00> : vector<4x256xf32>
    %20 = tpu.matmul %11, %17, %cst_13 {dimension_numbers = #tpu.dot_dimension_numbers<[1], [0], [0], [1], [0, 0, 1, 1], [], []>} : vector<4x256xf32>, vector<256x256xf32>, vector<4x256xf32> -> vector<4x256xf32>
    %21 = tpu.reciprocal %19 : vector<1x256xf32> -> vector<1x256xf32>
    %22 = vector.broadcast %21 : vector<1x256xf32> to vector<4x256xf32>
    %23 = arith.mulf %20, %22 : vector<4x256xf32>
    %cst_14 = arith.constant dense<0.000000e+00> : vector<4x256xf32>
    %24 = tpu.matmul %2, %23, %cst_14 {dimension_numbers = #tpu.dot_dimension_numbers<[1], [0], [0], [1], [0, 0, 1, 1], [], []>} : vector<4x4xf32>, vector<4x256xf32>, vector<4x256xf32> -> vector<4x256xf32>
    %25 = vector.broadcast %3 : vector<4x1xf32> to vector<4x256xf32>
    %26 = arith.addf %24, %25 : vector<4x256xf32>
    %c0_15 = arith.constant 0 : index
    %c0_16 = arith.constant 0 : index
    %c0_17 = arith.constant 0 : index
    %27 = vector.load %arg1[%c0_15, %c0_16, %c0_17] : memref<2x4x256xf32, #tpu.memory_space<vmem>>, vector<1x4x256xf32>
    %28 = vector.shape_cast %27 : vector<1x4x256xf32> to vector<4x256xf32>
    %29 = arith.addf %26, %28 : vector<4x256xf32>
    %c0_18 = arith.constant 0 : index
    %c0_19 = arith.constant 0 : index
    %c0_20 = arith.constant 0 : index
    %30 = vector.load %arg6[%c0_18, %c0_19, %c0_20] : memref<2x4x256xf32, #tpu.memory_space<vmem>>, vector<1x4x256xf32>
    %31 = vector.shape_cast %30 : vector<1x4x256xf32> to vector<4x256xf32>
    %32 = vector.shape_cast %29 : vector<4x256xf32> to vector<1x4x256xf32>
    tpu.vector_store %arg6[%c0_18, %c0_19, %c0_20], %32 {strides = array<i32>} : memref<2x4x256xf32, #tpu.memory_space<vmem>>, vector<1x4x256xf32>,
    %c1 = arith.constant 1 : index
    %c0_21 = arith.constant 0 : index
    %c0_22 = arith.constant 0 : index
    %33 = vector.load %arg1[%c1, %c0_21, %c0_22] : memref<2x4x256xf32, #tpu.memory_space<vmem>>, vector<1x4x256xf32>
    %34 = vector.shape_cast %33 : vector<1x4x256xf32> to vector<4x256xf32>
    %cst_23 = arith.constant dense<0.000000e+00> : vector<12x256xf32>
    %35 = tpu.matmul %0, %34, %cst_23 {dimension_numbers = #tpu.dot_dimension_numbers<[1], [0], [0], [1], [0, 0, 1, 1], [], []>} : vector<12x4xf32>, vector<4x256xf32>, vector<12x256xf32> -> vector<12x256xf32>
    %36 = vector.broadcast %1 : vector<12x1xf32> to vector<12x256xf32>
    %37 = arith.addf %35, %36 : vector<12x256xf32>
    %38 = vector.extract_strided_slice %37 {offsets = [0, 0], sizes = [4, 256], strides = [1, 1]} : vector<12x256xf32> to vector<4x256xf32>
    %39 = vector.extract_strided_slice %37 {offsets = [4, 0], sizes = [4, 256], strides = [1, 1]} : vector<12x256xf32> to vector<4x256xf32>
    %40 = vector.extract_strided_slice %37 {offsets = [8, 0], sizes = [4, 256], strides = [1, 1]} : vector<12x256xf32> to vector<4x256xf32>
    %cst_24 = arith.constant dense<0.000000e+00> : vector<256x256xf32>
    %41 = tpu.matmul %39, %38, %cst_24 {dimension_numbers = #tpu.dot_dimension_numbers<[0], [0], [1], [1], [0, 1, 1, 1], [], []>} : vector<4x256xf32>, vector<4x256xf32>, vector<256x256xf32> -> vector<256x256xf32>
    %cst_25 = arith.constant dense<0xFF800000> : vector<256xf32>
    %42 = vector.multi_reduction <maximumf>, %41, %cst_25 [0] : vector<256x256xf32> to vector<256xf32>
    %43 = vector.shape_cast %42 : vector<256xf32> to vector<1x256xf32>
    %44 = vector.broadcast %43 : vector<1x256xf32> to vector<256x256xf32>
    %45 = arith.subf %41, %44 : vector<256x256xf32>
    %46 = math.exp %45 : vector<256x256xf32>
    %cst_26 = arith.constant dense<0.000000e+00> : vector<256xf32>
    %47 = vector.multi_reduction <add>, %46, %cst_26 [0] : vector<256x256xf32> to vector<256xf32>
    %48 = vector.shape_cast %47 : vector<256xf32> to vector<1x256xf32>
    %cst_27 = arith.constant dense<0.000000e+00> : vector<4x256xf32>
    %49 = tpu.matmul %40, %46, %cst_27 {dimension_numbers = #tpu.dot_dimension_numbers<[1], [0], [0], [1], [0, 0, 1, 1], [], []>} : vector<4x256xf32>, vector<256x256xf32>, vector<4x256xf32> -> vector<4x256xf32>
    %50 = tpu.reciprocal %48 : vector<1x256xf32> -> vector<1x256xf32>
    %51 = vector.broadcast %50 : vector<1x256xf32> to vector<4x256xf32>
    %52 = arith.mulf %49, %51 : vector<4x256xf32>
    %cst_28 = arith.constant dense<0.000000e+00> : vector<4x256xf32>
    %53 = tpu.matmul %2, %52, %cst_28 {dimension_numbers = #tpu.dot_dimension_numbers<[1], [0], [0], [1], [0, 0, 1, 1], [], []>} : vector<4x4xf32>, vector<4x256xf32>, vector<4x256xf32> -> vector<4x256xf32>
    %54 = vector.broadcast %3 : vector<4x1xf32> to vector<4x256xf32>
    %55 = arith.addf %53, %54 : vector<4x256xf32>
    %c1_29 = arith.constant 1 : index
    %c0_30 = arith.constant 0 : index
    %c0_31 = arith.constant 0 : index
    %56 = vector.load %arg1[%c1_29, %c0_30, %c0_31] : memref<2x4x256xf32, #tpu.memory_space<vmem>>, vector<1x4x256xf32>
    %57 = vector.shape_cast %56 : vector<1x4x256xf32> to vector<4x256xf32>
    %58 = arith.addf %55, %57 : vector<4x256xf32>
    %c1_32 = arith.constant 1 : index
    %c0_33 = arith.constant 0 : index
    %c0_34 = arith.constant 0 : index
    %59 = vector.load %arg6[%c1_32, %c0_33, %c0_34] : memref<2x4x256xf32, #tpu.memory_space<vmem>>, vector<1x4x256xf32>
    %60 = vector.shape_cast %59 : vector<1x4x256xf32> to vector<4x256xf32>
    %61 = vector.shape_cast %58 : vector<4x256xf32> to vector<1x4x256xf32>
    tpu.vector_store %arg6[%c1_32, %c0_33, %c0_34], %61 {strides = array<i32>} : memref<2x4x256xf32, #tpu.memory_space<vmem>>, vector<1x4x256xf32>,
    return
  }
  func.func @transform_0(%arg0: i32) -> (i32, i32, i32) {
    %c0_i32 = arith.constant 0 : i32
    %c0_i32_0 = arith.constant 0 : i32
    %c0_i32_1 = arith.constant 0 : i32
    return %arg0, %c0_i32, %c0_i32_0 : i32, i32, i32
  }
  func.func @transform_1(%arg0: i32) -> (i32, i32) {
    %c0_i32 = arith.constant 0 : i32
    %c0_i32_0 = arith.constant 0 : i32
    %c0_i32_1 = arith.constant 0 : i32
    return %c0_i32, %c0_i32_0 : i32, i32
  }
  func.func @transform_2(%arg0: i32) -> (i32, i32) {
    %c0_i32 = arith.constant 0 : i32
    %c0_i32_0 = arith.constant 0 : i32
    %c0_i32_1 = arith.constant 0 : i32
    return %c0_i32, %c0_i32_0 : i32, i32
  }
  func.func @transform_3(%arg0: i32) -> (i32, i32) {
    %c0_i32 = arith.constant 0 : i32
    %c0_i32_0 = arith.constant 0 : i32
    %c0_i32_1 = arith.constant 0 : i32
    return %c0_i32, %c0_i32_0 : i32, i32
  }
  func.func @transform_4(%arg0: i32) -> (i32, i32) {
    %c0_i32 = arith.constant 0 : i32
    %c0_i32_0 = arith.constant 0 : i32
    %c0_i32_1 = arith.constant 0 : i32
    return %c0_i32, %c0_i32_0 : i32, i32
  }
  func.func @transform_5(%arg0: i32) -> (i32, i32, i32) {
    %c0_i32 = arith.constant 0 : i32
    %c0_i32_0 = arith.constant 0 : i32
    %c0_i32_1 = arith.constant 0 : i32
    return %arg0, %c0_i32, %c0_i32_0 : i32, i32, i32
  }
}

</mosaic_0001>

<llo_original>
// kernel: tpu_custom_call.1
$region0: #{tpu_custom_call.1}
  #allocation0 [shape = 'u32[]', space=smem, size = 0x4, offset = 0x4, fixed_abs, tag = 'smem constant byte address 0x4 - core index']
  #allocation1 [shape = 'u32[144,128]{1,0:T(1,128)}', space=vmem, size = 0x12000, scoped, tag = 'internal scratch']
  %s0 = inlined_call_operand.vmem [shape: f32[2,4,256], index: 0, kind: input, shape index: {}]
  %s1 = inlined_call_operand.vmem [shape: f32[12,4], index: 1, kind: input, shape index: {}]
  %s2 = inlined_call_operand.vmem [shape: f32[12,1], index: 2, kind: input, shape index: {}]
  %s3 = inlined_call_operand.vmem [shape: f32[4,4], index: 3, kind: input, shape index: {}]
  %s4 = inlined_call_operand.vmem [shape: f32[4,1], index: 4, kind: input, shape index: {}]
  %s5 = inlined_call_operand.hbm [shape: f32[2,4,256], index: 5, kind: output, shape index: {}]
  %s6 = sld [smem:[#allocation0]]
  $region30: #{tpu_custom_call.1} parent=0
    _
  %s8 = ssub.s32 1, %s6
  %s9 = scalar_select 0, %s8, %s6
  $region1: #{tpu_custom_call.1} parent=0
    #allocation2 [shape = 'u8[8192]{0}', space=vmem, size = 0x2000, scoped, tag = 'output window, operand 0, single buffered']
    #allocation3 [shape = 's32[1]{0}', space=sflag, size = 0x4, scoped, tag = 'scoped memory for tpu_custom_call.1']
    %10 = vsyncpa [#allocation3], 0
    // Predicated region
    $region2: #{tpu_custom_call.1} parent=1 // pred_check
      _
    $region3: #{tpu_custom_call.1} parent=1 // pred_check_branch
      %12 = sbr.rel (0) target = $region5
    $region4: #{tpu_custom_call.1} parent=1 // pred_region
      _
    $region5: #{tpu_custom_call.1} parent=1 // pred_fallthru
      _
    // Predicated region
    $region6: #{tpu_custom_call.1} parent=1 // pred_check
      _
    $region7: #{tpu_custom_call.1} parent=1 // pred_check_branch
      %14 = sbr.rel (0) target = $region9
    $region8: #{tpu_custom_call.1} parent=1 // pred_region
      _
    $region9: #{tpu_custom_call.1} parent=1 // pred_fallthru
      _
    // Predicated region
    $region10: #{tpu_custom_call.1} parent=1 // pred_check
      _
    $region11: #{tpu_custom_call.1} parent=1 // pred_check_branch
      %16 = sbr.rel (0) target = $region13
    $region12: #{tpu_custom_call.1} parent=1 // pred_region
      _
    $region13: #{tpu_custom_call.1} parent=1 // pred_fallthru
      _
    // Predicated region
    $region14: #{tpu_custom_call.1} parent=1 // pred_check
      _
    $region15: #{tpu_custom_call.1} parent=1 // pred_check_branch
      %18 = sbr.rel (0) target = $region17
    $region16: #{tpu_custom_call.1} parent=1 // pred_region
      _
    $region17: #{tpu_custom_call.1} parent=1 // pred_fallthru
      _
    // Predicated region
    $region18: #{tpu_custom_call.1} parent=1 // pred_check
      _
    $region19: #{tpu_custom_call.1} parent=1 // pred_check_branch
      %20 = sbr.rel (0) target = $region21
    $region20: #{tpu_custom_call.1} parent=1 // pred_region
      _
    $region21: #{tpu_custom_call.1} parent=1 // pred_fallthru
      _
    %v21 = vld [vmem:[%s1] sm:$0xff]
    %v22 = vld [vmem:[%s1 + $0x8] sm:$0xf]
    %v23 = vld [vmem:[%s2] sm:$0xff]
    %v24 = vld [vmem:[%s2 + $0x8] sm:$0xf]
    %v25 = vld [vmem:[%s3] sm:$0xf]
    %v26 = vld [vmem:[%s4] sm:$0xf]
    %v27 = vld [vmem:[%s0] sm:$0xff]
    %29 = vset.pattern.permute.xlu0 0
    %30 = vperm.xlu0 %29, %v23
    %v31 = vpop.permute.xlu0 %30
    %34 = vset.pattern.permute.xlu0 0
    %35 = vperm.xlu0 %34, %v24
    %v36 = vpop.permute.xlu0 %35
    %v39 = vcombine.high %v27, %v27
    %vm40 = vcmask 31744
    %v42 = vsel %vm40, %v21, 0
    %v45 = vsel %vm40, %v22, 0
    %vm47 = vcmask 1043456
    %v48 = vsel %vm47, %v27, 0
    %v50 = vsel %vm47, %v39, 0
    %52 = vmatprep.subr.mxu0 %v50
    %53 = vmatpush1.msra.mxu0 %v48
    %54 = vmatprep.subr.mxu0 0.0
    %55 = vmatpush1.msra.mxu0 0.0
    %56 = vmatprep.subr.mxu0 0.0
    %57 = vmatpush1.msra.mxu0 0.0
    %58 = vmatprep.subr.mxu0 0.0
    %59 = vmatpush1.msra.mxu0 0.0
    %60 = vmatprep.subr.mxu0 0.0
    %61 = vmatpush1.msra.mxu0 0.0
    %62 = vmatprep.subr.mxu0 0.0
    %63 = vmatpush1.msra.mxu0 0.0
    %64 = vmatprep.subr.mxu0 0.0
    %65 = vmatpush1.msra.mxu0 0.0
    %66 = vmatprep.subr.mxu0 0.0
    %67 = vmatpush1.msra.mxu0 0.0
    %68 = vmatprep.subr.mxu0 0.0
    %69 = vmatpush1.msra.mxu0 0.0
    %70 = vmatprep.subr.mxu0 0.0
    %71 = vmatpush1.msra.mxu0 0.0
    %72 = vmatprep.subr.mxu0 0.0
    %73 = vmatpush1.msra.mxu0 0.0
    %74 = vmatprep.subr.mxu0 0.0
    %75 = vmatpush1.msra.mxu0 0.0
    %76 = vmatprep.subr.mxu0 0.0
    %77 = vmatpush1.msra.mxu0 0.0
    %78 = vmatprep.subr.mxu0 0.0
    %79 = vmatpush1.msra.mxu0 0.0
    %80 = vmatprep.subr.mxu0 0.0
    %81 = vmatpush1.msra.mxu0 0.0
    %82 = vmatprep.subr.mxu0 0.0
    %83 = vmatpush1.msra.mxu0 0.0
    %84 = vmatprep.subr.mxu0 0.0
    %85 = vmatpush1.msra.mxu0 0.0
    %86 = vmatprep.subr.mxu0 0.0
    %87 = vmatpush1.msra.mxu0 0.0
    %88 = vmatprep.subr.mxu0 0.0
    %89 = vmatpush1.msra.mxu0 0.0
    %90 = vmatprep.subr.mxu0 0.0
    %91 = vmatpush1.msra.mxu0 0.0
    %92 = vmatprep.subr.mxu0 0.0
    %93 = vmatpush1.msra.mxu0 0.0
    %94 = vmatprep.subr.mxu0 0.0
    %95 = vmatpush1.msra.mxu0 0.0
    %96 = vmatprep.subr.mxu0 0.0
    %97 = vmatpush1.msra.mxu0 0.0
    %98 = vmatprep.subr.mxu0 0.0
    %99 = vmatpush1.msra.mxu0 0.0
    %100 = vmatprep.subr.mxu0 0.0
    %101 = vmatpush1.msra.mxu0 0.0
    %102 = vmatprep.subr.mxu0 0.0
    %103 = vmatpush1.msra.mxu0 0.0
    %104 = vmatprep.subr.mxu0 0.0
    %105 = vmatpush1.msra.mxu0 0.0
    %106 = vmatprep.subr.mxu0 0.0
    %107 = vmatpush1.msra.mxu0 0.0
    %108 = vmatprep.subr.mxu0 0.0
    %109 = vmatpush1.msra.mxu0 0.0
    %110 = vmatprep.subr.mxu0 0.0
    %111 = vmatpush1.msra.mxu0 0.0
    %112 = vmatprep.subr.mxu0 0.0
    %113 = vmatpush1.msra.mxu0 0.0
    %114 = vmatprep.subr.mxu0 0.0
    %115 = vmatpush1.msra.mxu0 0.0
    %116 = vmatprep.mubr.f32.mxu0 0.0
    %117 = vmatmul.mubr.f32.gmra.mrb[0].mxu0 %v42
    %v118 = vpop.f32.mrb[0].mxu0
    %v119 = vadd.f32 %v31, %v118
    %v120 = vpop.f32.mrb[0].mxu0
    %v121 = vadd.f32 %v31, %v120
    %122 = vmatprep.mubr.f32.mxu0 0.0
    %123 = vmatmul.mubr.f32.gmra.mrb[0].mxu0 %v45
    %v124 = vpop.f32.mrb[0].mxu0
    %v125 = vadd.f32 %v36, %v124
    %v126 = vpop.f32.mrb[0].mxu0
    %v127 = vadd.f32 %v36, %v126
    %128 = vdwg.mxu0
    %v131 = vrot.slane %v119, 4
    %v132 = vrot.slane %v121, 4
    %135 = vxpose.xlu0.b32.start [1/16] %v131, 128
    %136 = vxpose.xlu0.b32.cont [2/16] 0.0, 128
    %137 = vxpose.xlu0.b32.cont [3/16] 0.0, 128
    %138 = vxpose.xlu0.b32.cont [4/16] 0.0, 128
    %139 = vxpose.xlu0.b32.cont [5/16] 0.0, 128
    %140 = vxpose.xlu0.b32.cont [6/16] 0.0, 128
    %141 = vxpose.xlu0.b32.cont [7/16] 0.0, 128
    %142 = vxpose.xlu0.b32.cont [8/16] 0.0, 128
    %143 = vxpose.xlu0.b32.cont [9/16] 0.0, 128
    %144 = vxpose.xlu0.b32.cont [10/16] 0.0, 128
    %145 = vxpose.xlu0.b32.cont [11/16] 0.0, 128
    %146 = vxpose.xlu0.b32.cont [12/16] 0.0, 128
    %147 = vxpose.xlu0.b32.cont [13/16] 0.0, 128
    %148 = vxpose.xlu0.b32.cont [14/16] 0.0, 128
    %149 = vxpose.xlu0.b32.cont [15/16] 0.0, 128
    %150 = vxpose.xlu0.b32.end [16/16] 0.0, 128
    %v151 = vpop.trf.xlu0
    %v152 = vpop.trf.xlu0
    %v153 = vpop.trf.xlu0
    %v154 = vpop.trf.xlu0
    %v155 = vpop.trf.xlu0
    %v156 = vpop.trf.xlu0
    %v157 = vpop.trf.xlu0
    %v158 = vpop.trf.xlu0
    %v159 = vpop.trf.xlu0
    %v160 = vpop.trf.xlu0
    %v161 = vpop.trf.xlu0
    %v162 = vpop.trf.xlu0
    %v163 = vpop.trf.xlu0
    %v164 = vpop.trf.xlu0
    %v165 = vpop.trf.xlu0
    %v166 = vpop.trf.xlu0
    %167 = vxpose.xlu0.b32.start [1/16] %v132, 128
    %168 = vxpose.xlu0.b32.cont [2/16] 0.0, 128
    %169 = vxpose.xlu0.b32.cont [3/16] 0.0, 128
    %170 = vxpose.xlu0.b32.cont [4/16] 0.0, 128
    %171 = vxpose.xlu0.b32.cont [5/16] 0.0, 128
    %172 = vxpose.xlu0.b32.cont [6/16] 0.0, 128
    %173 = vxpose.xlu0.b32.cont [7/16] 0.0, 128
    %174 = vxpose.xlu0.b32.cont [8/16] 0.0, 128
    %175 = vxpose.xlu0.b32.cont [9/16] 0.0, 128
    %176 = vxpose.xlu0.b32.cont [10/16] 0.0, 128
    %177 = vxpose.xlu0.b32.cont [11/16] 0.0, 128
    %178 = vxpose.xlu0.b32.cont [12/16] 0.0, 128
    %179 = vxpose.xlu0.b32.cont [13/16] 0.0, 128
    %180 = vxpose.xlu0.b32.cont [14/16] 0.0, 128
    %181 = vxpose.xlu0.b32.cont [15/16] 0.0, 128
    %182 = vxpose.xlu0.b32.end [16/16] 0.0, 128
    %v183 = vpop.trf.xlu0
    %v184 = vpop.trf.xlu0
    %v185 = vpop.trf.xlu0
    %v186 = vpop.trf.xlu0
    %v187 = vpop.trf.xlu0
    %v188 = vpop.trf.xlu0
    %v189 = vpop.trf.xlu0
    %v190 = vpop.trf.xlu0
    %v191 = vpop.trf.xlu0
    %v192 = vpop.trf.xlu0
    %v193 = vpop.trf.xlu0
    %v194 = vpop.trf.xlu0
    %v195 = vpop.trf.xlu0
    %v196 = vpop.trf.xlu0
    %v197 = vpop.trf.xlu0
    %v198 = vpop.trf.xlu0
    %v200 = vsel %vm40, %v151, 0
    %v203 = vsel %vm40, %v152, 0
    %v206 = vsel %vm40, %v153, 0
    %v209 = vsel %vm40, %v154, 0
    %v212 = vsel %vm40, %v155, 0
    %v215 = vsel %vm40, %v156, 0
    %v218 = vsel %vm40, %v157, 0
    %v221 = vsel %vm40, %v158, 0
    %v224 = vsel %vm40, %v159, 0
    %v227 = vsel %vm40, %v160, 0
    %v230 = vsel %vm40, %v161, 0
    %v233 = vsel %vm40, %v162, 0
    %v236 = vsel %vm40, %v163, 0
    %v239 = vsel %vm40, %v164, 0
    %v242 = vsel %vm40, %v165, 0
    %v245 = vsel %vm40, %v166, 0
    %v248 = vsel %vm40, %v183, 0
    %v251 = vsel %vm40, %v184, 0
    %v254 = vsel %vm40, %v185, 0
    %v257 = vsel %vm40, %v186, 0
    %v260 = vsel %vm40, %v187, 0
    %v263 = vsel %vm40, %v188, 0
    %v266 = vsel %vm40, %v189, 0
    %v269 = vsel %vm40, %v190, 0
    %v272 = vsel %vm40, %v191, 0
    %v275 = vsel %vm40, %v192, 0
    %v278 = vsel %vm40, %v193, 0
    %v281 = vsel %vm40, %v194, 0
    %v284 = vsel %vm40, %v195, 0
    %v287 = vsel %vm40, %v196, 0
    %v290 = vsel %vm40, %v197, 0
    %v293 = vsel %vm40, %v198, 0
    %v295 = vsel %vm47, %v119, 0
    %v297 = vsel %vm47, %v121, 0
    %299 = vmatprep.subr.mxu0 %v297
    %300 = vmatpush1.msra.mxu0 %v295
    %301 = vmatprep.subr.mxu0 0.0
    %302 = vmatpush1.msra.mxu0 0.0
    %303 = vmatprep.subr.mxu0 0.0
    %304 = vmatpush1.msra.mxu0 0.0
    %305 = vmatprep.subr.mxu0 0.0
    %306 = vmatpush1.msra.mxu0 0.0
    %307 = vmatprep.subr.mxu0 0.0
    %308 = vmatpush1.msra.mxu0 0.0
    %309 = vmatprep.subr.mxu0 0.0
    %310 = vmatpush1.msra.mxu0 0.0
    %311 = vmatprep.subr.mxu0 0.0
    %312 = vmatpush1.msra.mxu0 0.0
    %313 = vmatprep.subr.mxu0 0.0
    %314 = vmatpush1.msra.mxu0 0.0
    %315 = vmatprep.subr.mxu0 0.0
    %316 = vmatpush1.msra.mxu0 0.0
    %317 = vmatprep.subr.mxu0 0.0
    %318 = vmatpush1.msra.mxu0 0.0
    %319 = vmatprep.subr.mxu0 0.0
    %320 = vmatpush1.msra.mxu0 0.0
    %321 = vmatprep.subr.mxu0 0.0
    %322 = vmatpush1.msra.mxu0 0.0
    %323 = vmatprep.subr.mxu0 0.0
    %324 = vmatpush1.msra.mxu0 0.0
    %325 = vmatprep.subr.mxu0 0.0
    %326 = vmatpush1.msra.mxu0 0.0
    %327 = vmatprep.subr.mxu0 0.0
    %328 = vmatpush1.msra.mxu0 0.0
    %329 = vmatprep.subr.mxu0 0.0
    %330 = vmatpush1.msra.mxu0 0.0
    %331 = vmatprep.subr.mxu0 0.0
    %332 = vmatpush1.msra.mxu0 0.0
    %333 = vmatprep.subr.mxu0 0.0
    %334 = vmatpush1.msra.mxu0 0.0
    %335 = vmatprep.subr.mxu0 0.0
    %336 = vmatpush1.msra.mxu0 0.0
    %337 = vmatprep.subr.mxu0 0.0
    %338 = vmatpush1.msra.mxu0 0.0
    %339 = vmatprep.subr.mxu0 0.0
    %340 = vmatpush1.msra.mxu0 0.0
    %341 = vmatprep.subr.mxu0 0.0
    %342 = vmatpush1.msra.mxu0 0.0
    %343 = vmatprep.subr.mxu0 0.0
    %344 = vmatpush1.msra.mxu0 0.0
    %345 = vmatprep.subr.mxu0 0.0
    %346 = vmatpush1.msra.mxu0 0.0
    %347 = vmatprep.subr.mxu0 0.0
    %348 = vmatpush1.msra.mxu0 0.0
    %349 = vmatprep.subr.mxu0 0.0
    %350 = vmatpush1.msra.mxu0 0.0
    %351 = vmatprep.subr.mxu0 0.0
    %352 = vmatpush1.msra.mxu0 0.0
    %353 = vmatprep.subr.mxu0 0.0
    %354 = vmatpush1.msra.mxu0 0.0
    %355 = vmatprep.subr.mxu0 0.0
    %356 = vmatpush1.msra.mxu0 0.0
    %357 = vmatprep.subr.mxu0 0.0
    %358 = vmatpush1.msra.mxu0 0.0
    %359 = vmatprep.subr.mxu0 0.0
    %360 = vmatpush1.msra.mxu0 0.0
    %361 = vmatprep.subr.mxu0 0.0
    %362 = vmatpush1.msra.mxu0 0.0
    %363 = vmatprep.mubr.f32.mxu0 0.0
    %364 = vmatmul.mubr.f32.gmra.mrb[0].mxu0 %v200
    %v365 = vpop.f32.mrb[0].mxu0
    %v366 = vadd.f32 0.0, %v365
    %v367 = vpop.f32.mrb[0].mxu0
    %v368 = vadd.f32 0.0, %v367
    %369 = vmatprep.mubr.f32.mxu0 0.0
    %370 = vmatmul.mubr.f32.gmra.mrb[0].mxu0 %v203
    %v371 = vpop.f32.mrb[0].mxu0
    %v372 = vadd.f32 0.0, %v371
    %v373 = vpop.f32.mrb[0].mxu0
    %v374 = vadd.f32 0.0, %v373
    %375 = vmatprep.mubr.f32.mxu0 0.0
    %376 = vmatmul.mubr.f32.gmra.mrb[0].mxu0 %v206
    %v377 = vpop.f32.mrb[0].mxu0
    %v378 = vadd.f32 0.0, %v377
    %v379 = vpop.f32.mrb[0].mxu0
    %v380 = vadd.f32 0.0, %v379
    %381 = vmatprep.mubr.f32.mxu0 0.0
    %382 = vmatmul.mubr.f32.gmra.mrb[0].mxu0 %v209
    %v383 = vpop.f32.mrb[0].mxu0
    %v384 = vadd.f32 0.0, %v383
    %v385 = vpop.f32.mrb[0].mxu0
    %v386 = vadd.f32 0.0, %v385
    %387 = vmatprep.mubr.f32.mxu0 0.0
    %388 = vmatmul.mubr.f32.gmra.mrb[0].mxu0 %v212
    %v389 = vpop.f32.mrb[0].mxu0
    %v390 = vadd.f32 0.0, %v389
    %v391 = vpop.f32.mrb[0].mxu0
    %v392 = vadd.f32 0.0, %v391
    %393 = vmatprep.mubr.f32.mxu0 0.0
    %394 = vmatmul.mubr.f32.gmra.mrb[0].mxu0 %v215
    %v395 = vpop.f32.mrb[0].mxu0
    %v396 = vadd.f32 0.0, %v395
    %v397 = vpop.f32.mrb[0].mxu0
    %v398 = vadd.f32 0.0, %v397
    %399 = vmatprep.mubr.f32.mxu0 0.0
    %400 = vmatmul.mubr.f32.gmra.mrb[0].mxu0 %v218
    %v401 = vpop.f32.mrb[0].mxu0
    %v402 = vadd.f32 0.0, %v401
    %v403 = vpop.f32.mrb[0].mxu0
    %v404 = vadd.f32 0.0, %v403
    %405 = vmatprep.mubr.f32.mxu0 0.0
    %406 = vmatmul.mubr.f32.gmra.mrb[0].mxu0 %v221
    %v407 = vpop.f32.mrb[0].mxu0
    %v408 = vadd.f32 0.0, %v407
    %v409 = vpop.f32.mrb[0].mxu0
    %v410 = vadd.f32 0.0, %v409
    %411 = vmatprep.mubr.f32.mxu0 0.0
    %412 = vmatmul.mubr.f32.gmra.mrb[0].mxu0 %v224
    %v413 = vpop.f32.mrb[0].mxu0
    %v414 = vadd.f32 0.0, %v413
    %v415 = vpop.f32.mrb[0].mxu0
    %v416 = vadd.f32 0.0, %v415
    %417 = vmatprep.mubr.f32.mxu0 0.0
    %418 = vmatmul.mubr.f32.gmra.mrb[0].mxu0 %v227
    %v419 = vpop.f32.mrb[0].mxu0
    %v420 = vadd.f32 0.0, %v419
    %v421 = vpop.f32.mrb[0].mxu0
    %v422 = vadd.f32 0.0, %v421
    %423 = vmatprep.mubr.f32.mxu0 0.0
    %424 = vmatmul.mubr.f32.gmra.mrb[0].mxu0 %v230
    %v425 = vpop.f32.mrb[0].mxu0
    %v426 = vadd.f32 0.0, %v425
    %v427 = vpop.f32.mrb[0].mxu0
    %v428 = vadd.f32 0.0, %v427
    %429 = vmatprep.mubr.f32.mxu0 0.0
    %430 = vmatmul.mubr.f32.gmra.mrb[0].mxu0 %v233
    %v431 = vpop.f32.mrb[0].mxu0
    %v432 = vadd.f32 0.0, %v431
    %v433 = vpop.f32.mrb[0].mxu0
    %v434 = vadd.f32 0.0, %v433
    %435 = vmatprep.mubr.f32.mxu0 0.0
    %436 = vmatmul.mubr.f32.gmra.mrb[0].mxu0 %v236
    %v437 = vpop.f32.mrb[0].mxu0
    %v438 = vadd.f32 0.0, %v437
    %v439 = vpop.f32.mrb[0].mxu0
    %v440 = vadd.f32 0.0, %v439
    %441 = vmatprep.mubr.f32.mxu0 0.0
    %442 = vmatmul.mubr.f32.gmra.mrb[0].mxu0 %v239
    %v443 = vpop.f32.mrb[0].mxu0
    %v444 = vadd.f32 0.0, %v443
    %v445 = vpop.f32.mrb[0].mxu0
    %v446 = vadd.f32 0.0, %v445
    %447 = vmatprep.mubr.f32.mxu0 0.0
    %448 = vmatmul.mubr.f32.gmra.mrb[0].mxu0 %v242
    %v449 = vpop.f32.mrb[0].mxu0
    %v450 = vadd.f32 0.0, %v449
    %v451 = vpop.f32.mrb[0].mxu0
    %v452 = vadd.f32 0.0, %v451
    %453 = vmatprep.mubr.f32.mxu0 0.0
    %454 = vmatmul.mubr.f32.gmra.mrb[0].mxu0 %v245
    %v455 = vpop.f32.mrb[0].mxu0
    %v456 = vadd.f32 0.0, %v455
    %v457 = vpop.f32.mrb[0].mxu0
    %v458 = vadd.f32 0.0, %v457
    %459 = vmatprep.mubr.f32.mxu0 0.0
    %460 = vmatmul.mubr.f32.gmra.mrb[0].mxu0 %v248
    %v461 = vpop.f32.mrb[0].mxu0
    %v462 = vadd.f32 0.0, %v461
    %v463 = vpop.f32.mrb[0].mxu0
    %v464 = vadd.f32 0.0, %v463
    %465 = vmatprep.mubr.f32.mxu0 0.0
    %466 = vmatmul.mubr.f32.gmra.mrb[0].mxu0 %v251
    %v467 = vpop.f32.mrb[0].mxu0
    %v468 = vadd.f32 0.0, %v467
    %v469 = vpop.f32.mrb[0].mxu0
    %v470 = vadd.f32 0.0, %v469
    %471 = vmatprep.mubr.f32.mxu0 0.0
    %472 = vmatmul.mubr.f32.gmra.mrb[0].mxu0 %v254
    %v473 = vpop.f32.mrb[0].mxu0
    %v474 = vadd.f32 0.0, %v473
    %v475 = vpop.f32.mrb[0].mxu0
    %v476 = vadd.f32 0.0, %v475
    %477 = vmatprep.mubr.f32.mxu0 0.0
    %478 = vmatmul.mubr.f32.gmra.mrb[0].mxu0 %v257
    %v479 = vpop.f32.mrb[0].mxu0
    %v480 = vadd.f32 0.0, %v479
    %v481 = vpop.f32.mrb[0].mxu0
    %v482 = vadd.f32 0.0, %v481
    %483 = vmatprep.mubr.f32.mxu0 0.0
    %484 = vmatmul.mubr.f32.gmra.mrb[0].mxu0 %v260
    %v485 = vpop.f32.mrb[0].mxu0
    %v486 = vadd.f32 0.0, %v485
    %v487 = vpop.f32.mrb[0].mxu0
    %v488 = vadd.f32 0.0, %v487
    %489 = vmatprep.mubr.f32.mxu0 0.0
    %490 = vmatmul.mubr.f32.gmra.mrb[0].mxu0 %v263
    %v491 = vpop.f32.mrb[0].mxu0
    %v492 = vadd.f32 0.0, %v491
    %v493 = vpop.f32.mrb[0].mxu0
    %v494 = vadd.f32 0.0, %v493
    %495 = vmatprep.mubr.f32.mxu0 0.0
    %496 = vmatmul.mubr.f32.gmra.mrb[0].mxu0 %v266
    %v497 = vpop.f32.mrb[0].mxu0
    %v498 = vadd.f32 0.0, %v497
    %v499 = vpop.f32.mrb[0].mxu0
    %v500 = vadd.f32 0.0, %v499
    %501 = vmatprep.mubr.f32.mxu0 0.0
    %502 = vmatmul.mubr.f32.gmra.mrb[0].mxu0 %v269
    %v503 = vpop.f32.mrb[0].mxu0
    %v504 = vadd.f32 0.0, %v503
    %v505 = vpop.f32.mrb[0].mxu0
    %v506 = vadd.f32 0.0, %v505
    %507 = vmatprep.mubr.f32.mxu0 0.0
    %508 = vmatmul.mubr.f32.gmra.mrb[0].mxu0 %v272
    %v509 = vpop.f32.mrb[0].mxu0
    %v510 = vadd.f32 0.0, %v509
    %v511 = vpop.f32.mrb[0].mxu0
    %v512 = vadd.f32 0.0, %v511
    %513 = vmatprep.mubr.f32.mxu0 0.0
    %514 = vmatmul.mubr.f32.gmra.mrb[0].mxu0 %v275
    %v515 = vpop.f32.mrb[0].mxu0
    %v516 = vadd.f32 0.0, %v515
    %v517 = vpop.f32.mrb[0].mxu0
    %v518 = vadd.f32 0.0, %v517
    %519 = vmatprep.mubr.f32.mxu0 0.0
    %520 = vmatmul.mubr.f32.gmra.mrb[0].mxu0 %v278
    %v521 = vpop.f32.mrb[0].mxu0
    %v522 = vadd.f32 0.0, %v521
    %v523 = vpop.f32.mrb[0].mxu0
    %v524 = vadd.f32 0.0, %v523
    %525 = vmatprep.mubr.f32.mxu0 0.0
    %526 = vmatmul.mubr.f32.gmra.mrb[0].mxu0 %v281
    %v527 = vpop.f32.mrb[0].mxu0
    %v528 = vadd.f32 0.0, %v527
    %v529 = vpop.f32.mrb[0].mxu0
    %v530 = vadd.f32 0.0, %v529
    %531 = vmatprep.mubr.f32.mxu0 0.0
    %532 = vmatmul.mubr.f32.gmra.mrb[0].mxu0 %v284
    %v533 = vpop.f32.mrb[0].mxu0
    %v534 = vadd.f32 0.0, %v533
    %v535 = vpop.f32.mrb[0].mxu0
    %v536 = vadd.f32 0.0, %v535
    %537 = vmatprep.mubr.f32.mxu0 0.0
    %538 = vmatmul.mubr.f32.gmra.mrb[0].mxu0 %v287
    %v539 = vpop.f32.mrb[0].mxu0
    %v540 = vadd.f32 0.0, %v539
    %v541 = vpop.f32.mrb[0].mxu0
    %v542 = vadd.f32 0.0, %v541
    %543 = vmatprep.mubr.f32.mxu0 0.0
    %544 = vmatmul.mubr.f32.gmra.mrb[0].mxu0 %v290
    %v545 = vpop.f32.mrb[0].mxu0
    %v546 = vadd.f32 0.0, %v545
    %v547 = vpop.f32.mrb[0].mxu0
    %v548 = vadd.f32 0.0, %v547
    %549 = vmatprep.mubr.f32.mxu0 0.0
    %550 = vmatmul.mubr.f32.gmra.mrb[0].mxu0 %v293
    %v551 = vpop.f32.mrb[0].mxu0
    %v552 = vadd.f32 0.0, %v551
    %v553 = vpop.f32.mrb[0].mxu0
    %v554 = vadd.f32 0.0, %v553
    %555 = vdwg.mxu0
    %v556 = vmax.f32 %v366, %v378
    %v557 = vmax.f32 %v372, %v384
    %v558 = vmax.f32 %v556, %v390
    %v559 = vmax.f32 %v557, %v396
    %v560 = vmax.f32 %v558, %v402
    %v561 = vmax.f32 %v559, %v408
    %v562 = vmax.f32 %v560, %v414
    %v563 = vmax.f32 %v561, %v420
    %v564 = vmax.f32 %v562, %v426
    %v565 = vmax.f32 %v563, %v432
    %v566 = vmax.f32 %v564, %v438
    %v567 = vmax.f32 %v565, %v444
    %v568 = vmax.f32 %v566, %v450
    %v569 = vmax.f32 %v567, %v456
    %v570 = vmax.f32 %v568, %v462
    %v571 = vmax.f32 %v569, %v468
    %v572 = vmax.f32 %v570, %v474
    %v573 = vmax.f32 %v571, %v480
    %v574 = vmax.f32 %v572, %v486
    %v575 = vmax.f32 %v573, %v492
    %v576 = vmax.f32 %v574, %v498
    %v577 = vmax.f32 %v575, %v504
    %v578 = vmax.f32 %v576, %v510
    %v579 = vmax.f32 %v577, %v516
    %v580 = vmax.f32 %v578, %v522
    %v581 = vmax.f32 %v579, %v528
    %v582 = vmax.f32 %v580, %v534
    %v583 = vmax.f32 %v581, %v540
    %v584 = vmax.f32 %v582, %v546
    %v585 = vmax.f32 %v583, %v552
    %v586 = vmax.f32 %v584, %v585
    %v587 = vrot.slane %v586, 4
    %v588 = vmax.f32 %v586, %v587
    %v589 = vrot.slane %v588, 2
    %v590 = vmax.f32 %v588, %v589
    %v591 = vrot.slane %v590, 1
    %v592 = vmax.f32 %v590, %v591
    %v593 = vmax.f32 %v368, %v380
    %v594 = vmax.f32 %v374, %v386
    %v595 = vmax.f32 %v593, %v392
    %v596 = vmax.f32 %v594, %v398
    %v597 = vmax.f32 %v595, %v404
    %v598 = vmax.f32 %v596, %v410
    %v599 = vmax.f32 %v597, %v416
    %v600 = vmax.f32 %v598, %v422
    %v601 = vmax.f32 %v599, %v428
    %v602 = vmax.f32 %v600, %v434
    %v603 = vmax.f32 %v601, %v440
    %v604 = vmax.f32 %v602, %v446
    %v605 = vmax.f32 %v603, %v452
    %v606 = vmax.f32 %v604, %v458
    %v607 = vmax.f32 %v605, %v464
    %v608 = vmax.f32 %v606, %v470
    %v609 = vmax.f32 %v607, %v476
    %v610 = vmax.f32 %v608, %v482
    %v611 = vmax.f32 %v609, %v488
    %v612 = vmax.f32 %v610, %v494
    %v613 = vmax.f32 %v611, %v500
    %v614 = vmax.f32 %v612, %v506
    %v615 = vmax.f32 %v613, %v512
    %v616 = vmax.f32 %v614, %v518
    %v617 = vmax.f32 %v615, %v524
    %v618 = vmax.f32 %v616, %v530
    %v619 = vmax.f32 %v617, %v536
    %v620 = vmax.f32 %v618, %v542
    %v621 = vmax.f32 %v619, %v548
    %v622 = vmax.f32 %v620, %v554
    %v623 = vmax.f32 %v621, %v622
    %v624 = vrot.slane %v623, 4
    %v625 = vmax.f32 %v623, %v624
    %v626 = vrot.slane %v625, 2
    %v627 = vmax.f32 %v625, %v626
    %v628 = vrot.slane %v627, 1
    %v629 = vmax.f32 %v627, %v628
    %v630 = vsub.f32 %v366, %v592
    %v631 = vsub.f32 %v368, %v629
    %v632 = vsub.f32 %v372, %v592
    %v633 = vsub.f32 %v374, %v629
    %v634 = vsub.f32 %v378, %v592
    %v635 = vsub.f32 %v380, %v629
    %v636 = vsub.f32 %v384, %v592
    %v637 = vsub.f32 %v386, %v629
    %v638 = vsub.f32 %v390, %v592
    %v639 = vsub.f32 %v392, %v629
    %v640 = vsub.f32 %v396, %v592
    %v641 = vsub.f32 %v398, %v629
    %v642 = vsub.f32 %v402, %v592
    %v643 = vsub.f32 %v404, %v629
    %v644 = vsub.f32 %v408, %v592
    %v645 = vsub.f32 %v410, %v629
    %v646 = vsub.f32 %v414, %v592
    %v647 = vsub.f32 %v416, %v629
    %v648 = vsub.f32 %v420, %v592
    %v649 = vsub.f32 %v422, %v629
    %v650 = vsub.f32 %v426, %v592
    %v651 = vsub.f32 %v428, %v629
    %v652 = vsub.f32 %v432, %v592
    %v653 = vsub.f32 %v434, %v629
    %v654 = vsub.f32 %v438, %v592
    %v655 = vsub.f32 %v440, %v629
    %v656 = vsub.f32 %v444, %v592
    %v657 = vsub.f32 %v446, %v629
    %v658 = vsub.f32 %v450, %v592
    %v659 = vsub.f32 %v452, %v629
    %v660 = vsub.f32 %v456, %v592
    %v661 = vsub.f32 %v458, %v629
    %v662 = vsub.f32 %v462, %v592
    %v663 = vsub.f32 %v464, %v629
    %v664 = vsub.f32 %v468, %v592
    %v665 = vsub.f32 %v470, %v629
    %v666 = vsub.f32 %v474, %v592
    %v667 = vsub.f32 %v476, %v629
    %v668 = vsub.f32 %v480, %v592
    %v669 = vsub.f32 %v482, %v629
    %v670 = vsub.f32 %v486, %v592
    %v671 = vsub.f32 %v488, %v629
    %v672 = vsub.f32 %v492, %v592
    %v673 = vsub.f32 %v494, %v629
    %v674 = vsub.f32 %v498, %v592
    %v675 = vsub.f32 %v500, %v629
    %v676 = vsub.f32 %v504, %v592
    %v677 = vsub.f32 %v506, %v629
    %v678 = vsub.f32 %v510, %v592
    %v679 = vsub.f32 %v512, %v629
    %v680 = vsub.f32 %v516, %v592
    %v681 = vsub.f32 %v518, %v629
    %v682 = vsub.f32 %v522, %v592
    %v683 = vsub.f32 %v524, %v629
    %v684 = vsub.f32 %v528, %v592
    %v685 = vsub.f32 %v530, %v629
    %v686 = vsub.f32 %v534, %v592
    %v687 = vsub.f32 %v536, %v629
    %v688 = vsub.f32 %v540, %v592
    %v689 = vsub.f32 %v542, %v629
    %v690 = vsub.f32 %v546, %v592
    %v691 = vsub.f32 %v548, %v629
    %v692 = vsub.f32 %v552, %v592
    %v693 = vsub.f32 %v554, %v629
    %v694 = vmul.f32 %v630, 1.442695
    %v695 = vpow.pop %v694
    %v696 = vmul.f32 %v631, 1.442695
    %v697 = vpow.pop %v696
    %v698 = vmul.f32 %v632, 1.442695
    %v699 = vpow.pop %v698
    %v700 = vmul.f32 %v633, 1.442695
    %v701 = vpow.pop %v700
    %v702 = vmul.f32 %v634, 1.442695
    %v703 = vpow.pop %v702
    %v704 = vmul.f32 %v635, 1.442695
    %v705 = vpow.pop %v704
    %v706 = vmul.f32 %v636, 1.442695
    %v707 = vpow.pop %v706
    %v708 = vmul.f32 %v637, 1.442695
    %v709 = vpow.pop %v708
    %v710 = vmul.f32 %v638, 1.442695
    %v711 = vpow.pop %v710
    %v712 = vmul.f32 %v639, 1.442695
    %v713 = vpow.pop %v712
    %v714 = vmul.f32 %v640, 1.442695
    %v715 = vpow.pop %v714
    %v716 = vmul.f32 %v641, 1.442695
    %v717 = vpow.pop %v716
    %v718 = vmul.f32 %v642, 1.442695
    %v719 = vpow.pop %v718
    %v720 = vmul.f32 %v643, 1.442695
    %v721 = vpow.pop %v720
    %v722 = vmul.f32 %v644, 1.442695
    %v723 = vpow.pop %v722
    %v724 = vmul.f32 %v645, 1.442695
    %v725 = vpow.pop %v724
    %v726 = vmul.f32 %v646, 1.442695
    %v727 = vpow.pop %v726
    %v728 = vmul.f32 %v647, 1.442695
    %v729 = vpow.pop %v728
    %v730 = vmul.f32 %v648, 1.442695
    %v731 = vpow.pop %v730
    %v732 = vmul.f32 %v649, 1.442695
    %v733 = vpow.pop %v732
    %v734 = vmul.f32 %v650, 1.442695
    %v735 = vpow.pop %v734
    %v736 = vmul.f32 %v651, 1.442695
    %v737 = vpow.pop %v736
    %v738 = vmul.f32 %v652, 1.442695
    %v739 = vpow.pop %v738
    %v740 = vmul.f32 %v653, 1.442695
    %v741 = vpow.pop %v740
    %v742 = vmul.f32 %v654, 1.442695
    %v743 = vpow.pop %v742
    %v744 = vmul.f32 %v655, 1.442695
    %v745 = vpow.pop %v744
    %v746 = vmul.f32 %v656, 1.442695
    %v747 = vpow.pop %v746
    %v748 = vmul.f32 %v657, 1.442695
    %v749 = vpow.pop %v748
    %v750 = vmul.f32 %v658, 1.442695
    %v751 = vpow.pop %v750
    %v752 = vmul.f32 %v659, 1.442695
    %v753 = vpow.pop %v752
    %v754 = vmul.f32 %v660, 1.442695
    %v755 = vpow.pop %v754
    %v756 = vmul.f32 %v661, 1.442695
    %v757 = vpow.pop %v756
    %v758 = vmul.f32 %v662, 1.442695
    %v759 = vpow.pop %v758
    %v760 = vmul.f32 %v663, 1.442695
    %v761 = vpow.pop %v760
    %v762 = vmul.f32 %v664, 1.442695
    %v763 = vpow.pop %v762
    %v764 = vmul.f32 %v665, 1.442695
    %v765 = vpow.pop %v764
    %v766 = vmul.f32 %v666, 1.442695
    %v767 = vpow.pop %v766
    %v768 = vmul.f32 %v667, 1.442695
    %v769 = vpow.pop %v768
    %v770 = vmul.f32 %v668, 1.442695
    %v771 = vpow.pop %v770
    %v772 = vmul.f32 %v669, 1.442695
    %v773 = vpow.pop %v772
    %v774 = vmul.f32 %v670, 1.442695
    %v775 = vpow.pop %v774
    %v776 = vmul.f32 %v671, 1.442695
    %v777 = vpow.pop %v776
    %v778 = vmul.f32 %v672, 1.442695
    %v779 = vpow.pop %v778
    %v780 = vmul.f32 %v673, 1.442695
    %v781 = vpow.pop %v780
    %v782 = vmul.f32 %v674, 1.442695
    %v783 = vpow.pop %v782
    %v784 = vmul.f32 %v675, 1.442695
    %v785 = vpow.pop %v784
    %v786 = vmul.f32 %v676, 1.442695
    %v787 = vpow.pop %v786
    %v788 = vmul.f32 %v677, 1.442695
    %v789 = vpow.pop %v788
    %v790 = vmul.f32 %v678, 1.442695
    %v791 = vpow.pop %v790
    %v792 = vmul.f32 %v679, 1.442695
    %v793 = vpow.pop %v792
    %v794 = vmul.f32 %v680, 1.442695
    %v795 = vpow.pop %v794
    %v796 = vmul.f32 %v681, 1.442695
    %v797 = vpow.pop %v796
    %v798 = vmul.f32 %v682, 1.442695
    %v799 = vpow.pop %v798
    %v800 = vmul.f32 %v683, 1.442695
    %v801 = vpow.pop %v800
    %v802 = vmul.f32 %v684, 1.442695
    %v803 = vpow.pop %v802
    %v804 = vmul.f32 %v685, 1.442695
    %v805 = vpow.pop %v804
    %v806 = vmul.f32 %v686, 1.442695
    %v807 = vpow.pop %v806
    %v808 = vmul.f32 %v687, 1.442695
    %v809 = vpow.pop %v808
    %v810 = vmul.f32 %v688, 1.442695
    %v811 = vpow.pop %v810
    %v812 = vmul.f32 %v689, 1.442695
    %v813 = vpow.pop %v812
    %v814 = vmul.f32 %v690, 1.442695
    %v815 = vpow.pop %v814
    %v816 = vmul.f32 %v691, 1.442695
    %v817 = vpow.pop %v816
    %v818 = vmul.f32 %v692, 1.442695
    %v819 = vpow.pop %v818
    %v820 = vmul.f32 %v693, 1.442695
    %v821 = vpow.pop %v820
    %v822 = vadd.f32 %v695, %v699
    %v823 = vadd.f32 %v822, %v703
    %v824 = vadd.f32 %v823, %v707
    %v825 = vadd.f32 %v824, %v711
    %v826 = vadd.f32 %v825, %v715
    %v827 = vadd.f32 %v826, %v719
    %v828 = vadd.f32 %v827, %v723
    %v829 = vadd.f32 %v828, %v727
    %v830 = vadd.f32 %v829, %v731
    %v831 = vadd.f32 %v830, %v735
    %v832 = vadd.f32 %v831, %v739
    %v833 = vadd.f32 %v832, %v743
    %v834 = vadd.f32 %v833, %v747
    %v835 = vadd.f32 %v834, %v751
    %v836 = vadd.f32 %v835, %v755
    %v837 = vadd.f32 %v836, %v759
    %v838 = vadd.f32 %v837, %v763
    %v839 = vadd.f32 %v838, %v767
    %v840 = vadd.f32 %v839, %v771
    %v841 = vadd.f32 %v840, %v775
    %v842 = vadd.f32 %v841, %v779
    %v843 = vadd.f32 %v842, %v783
    %v844 = vadd.f32 %v843, %v787
    %v845 = vadd.f32 %v844, %v791
    %v846 = vadd.f32 %v845, %v795
    %v847 = vadd.f32 %v846, %v799
    %v848 = vadd.f32 %v847, %v803
    %v849 = vadd.f32 %v848, %v807
    %v850 = vadd.f32 %v849, %v811
    %v851 = vadd.f32 %v850, %v815
    %v852 = vadd.f32 %v851, %v819
    %v853 = vrot.slane %v852, 4
    %v854 = vadd.f32 %v852, %v853
    %v855 = vrot.slane %v854, 2
    %v856 = vadd.f32 %v854, %v855
    %v857 = vrot.slane %v856, 1
    %v858 = vadd.f32 %v856, %v857
    %v859 = vadd.f32 %v697, %v701
    %v860 = vadd.f32 %v859, %v705
    %v861 = vadd.f32 %v860, %v709
    %v862 = vadd.f32 %v861, %v713
    %v863 = vadd.f32 %v862, %v717
    %v864 = vadd.f32 %v863, %v721
    %v865 = vadd.f32 %v864, %v725
    %v866 = vadd.f32 %v865, %v729
    %v867 = vadd.f32 %v866, %v733
    %v868 = vadd.f32 %v867, %v737
    %v869 = vadd.f32 %v868, %v741
    %v870 = vadd.f32 %v869, %v745
    %v871 = vadd.f32 %v870, %v749
    %v872 = vadd.f32 %v871, %v753
    %v873 = vadd.f32 %v872, %v757
    %v874 = vadd.f32 %v873, %v761
    %v875 = vadd.f32 %v874, %v765
    %v876 = vadd.f32 %v875, %v769
    %v877 = vadd.f32 %v876, %v773
    %v878 = vadd.f32 %v877, %v777
    %v879 = vadd.f32 %v878, %v781
    %v880 = vadd.f32 %v879, %v785
    %v881 = vadd.f32 %v880, %v789
    %v882 = vadd.f32 %v881, %v793
    %v883 = vadd.f32 %v882, %v797
    %v884 = vadd.f32 %v883, %v801
    %v885 = vadd.f32 %v884, %v805
    %v886 = vadd.f32 %v885, %v809
    %v887 = vadd.f32 %v886, %v813
    %v888 = vadd.f32 %v887, %v817
    %v889 = vadd.f32 %v888, %v821
    %v890 = vrot.slane %v889, 4
    %v891 = vadd.f32 %v889, %v890
    %v892 = vrot.slane %v891, 2
    %v893 = vadd.f32 %v891, %v892
    %v894 = vrot.slane %v893, 1
    %v895 = vadd.f32 %v893, %v894
    %896 = vmatprep.subr.mxu0 %v697
    %897 = vmatpush1.msra.mxu0 %v695
    %898 = vmatprep.subr.mxu0 %v701
    %899 = vmatpush1.msra.mxu0 %v699
    %900 = vmatprep.subr.mxu0 %v705
    %901 = vmatpush1.msra.mxu0 %v703
    %902 = vmatprep.subr.mxu0 %v709
    %903 = vmatpush1.msra.mxu0 %v707
    %904 = vmatprep.subr.mxu0 %v713
    %905 = vmatpush1.msra.mxu0 %v711
    %906 = vmatprep.subr.mxu0 %v717
    %907 = vmatpush1.msra.mxu0 %v715
    %908 = vmatprep.subr.mxu0 %v721
    %909 = vmatpush1.msra.mxu0 %v719
    %910 = vmatprep.subr.mxu0 %v725
    %911 = vmatpush1.msra.mxu0 %v723
    %912 = vmatprep.subr.mxu0 %v729
    %913 = vmatpush1.msra.mxu0 %v727
    %914 = vmatprep.subr.mxu0 %v733
    %915 = vmatpush1.msra.mxu0 %v731
    %916 = vmatprep.subr.mxu0 %v737
    %917 = vmatpush1.msra.mxu0 %v735
    %918 = vmatprep.subr.mxu0 %v741
    %919 = vmatpush1.msra.mxu0 %v739
    %920 = vmatprep.subr.mxu0 %v745
    %921 = vmatpush1.msra.mxu0 %v743
    %922 = vmatprep.subr.mxu0 %v749
    %923 = vmatpush1.msra.mxu0 %v747
    %924 = vmatprep.subr.mxu0 %v753
    %925 = vmatpush1.msra.mxu0 %v751
    %926 = vmatprep.subr.mxu0 %v757
    %927 = vmatpush1.msra.mxu0 %v755
    %928 = vmatprep.subr.mxu0 %v761
    %929 = vmatpush1.msra.mxu0 %v759
    %930 = vmatprep.subr.mxu0 %v765
    %931 = vmatpush1.msra.mxu0 %v763
    %932 = vmatprep.subr.mxu0 %v769
    %933 = vmatpush1.msra.mxu0 %v767
    %934 = vmatprep.subr.mxu0 %v773
    %935 = vmatpush1.msra.mxu0 %v771
    %936 = vmatprep.subr.mxu0 %v777
    %937 = vmatpush1.msra.mxu0 %v775
    %938 = vmatprep.subr.mxu0 %v781
    %939 = vmatpush1.msra.mxu0 %v779
    %940 = vmatprep.subr.mxu0 %v785
    %941 = vmatpush1.msra.mxu0 %v783
    %942 = vmatprep.subr.mxu0 %v789
    %943 = vmatpush1.msra.mxu0 %v787
    %944 = vmatprep.subr.mxu0 %v793
    %945 = vmatpush1.msra.mxu0 %v791
    %946 = vmatprep.subr.mxu0 %v797
    %947 = vmatpush1.msra.mxu0 %v795
    %948 = vmatprep.subr.mxu0 %v801
    %949 = vmatpush1.msra.mxu0 %v799
    %950 = vmatprep.subr.mxu0 %v805
    %951 = vmatpush1.msra.mxu0 %v803
    %952 = vmatprep.subr.mxu0 %v809
    %953 = vmatpush1.msra.mxu0 %v807
    %954 = vmatprep.subr.mxu0 %v813
    %955 = vmatpush1.msra.mxu0 %v811
    %956 = vmatprep.subr.mxu0 %v817
    %957 = vmatpush1.msra.mxu0 %v815
    %958 = vmatprep.subr.mxu0 %v821
    %959 = vmatpush1.msra.mxu0 %v819
    %960 = vmatprep.mubr.f32.mxu0 %v127
    %961 = vmatmul.mubr.f32.gmra.mrb[0].mxu0 %v125
    %v962 = vpop.f32.mrb[0].mxu0
    %v963 = vadd.f32 0.0, %v962
    %v964 = vpop.f32.mrb[0].mxu0
    %v965 = vadd.f32 0.0, %v964
    %966 = vdwg.mxu0
    %v967 = vrcp.pop %v858
    %v968 = vrcp.pop %v895
    %v969 = vmul.f32 %v963, %v967
    %v970 = vmul.f32 %v965, %v968
    %972 = vset.pattern.permute.xlu0 0
    %973 = vperm.xlu0 %972, %v26
    %v974 = vpop.permute.xlu0 %973
    %v977 = vsel %vm40, %v25, 0
    %v980 = vsel %vm47, %v969, 0
    %v983 = vsel %vm47, %v970, 0
    %985 = vmatprep.subr.mxu0 %v983
    %986 = vmatpush1.msra.mxu0 %v980
    %987 = vmatprep.subr.mxu0 0.0
    %988 = vmatpush1.msra.mxu0 0.0
    %989 = vmatprep.subr.mxu0 0.0
    %990 = vmatpush1.msra.mxu0 0.0
    %991 = vmatprep.subr.mxu0 0.0
    %992 = vmatpush1.msra.mxu0 0.0
    %993 = vmatprep.subr.mxu0 0.0
    %994 = vmatpush1.msra.mxu0 0.0
    %995 = vmatprep.subr.mxu0 0.0
    %996 = vmatpush1.msra.mxu0 0.0
    %997 = vmatprep.subr.mxu0 0.0
    %998 = vmatpush1.msra.mxu0 0.0
    %999 = vmatprep.subr.mxu0 0.0
    %1000 = vmatpush1.msra.mxu0 0.0
    %1001 = vmatprep.subr.mxu0 0.0
    %1002 = vmatpush1.msra.mxu0 0.0
    %1003 = vmatprep.subr.mxu0 0.0
    %1004 = vmatpush1.msra.mxu0 0.0
    %1005 = vmatprep.subr.mxu0 0.0
    %1006 = vmatpush1.msra.mxu0 0.0
    %1007 = vmatprep.subr.mxu0 0.0
    %1008 = vmatpush1.msra.mxu0 0.0
    %1009 = vmatprep.subr.mxu0 0.0
    %1010 = vmatpush1.msra.mxu0 0.0
    %1011 = vmatprep.subr.mxu0 0.0
    %1012 = vmatpush1.msra.mxu0 0.0
    %1013 = vmatprep.subr.mxu0 0.0
    %1014 = vmatpush1.msra.mxu0 0.0
    %1015 = vmatprep.subr.mxu0 0.0
    %1016 = vmatpush1.msra.mxu0 0.0
    %1017 = vmatprep.subr.mxu0 0.0
    %1018 = vmatpush1.msra.mxu0 0.0
    %1019 = vmatprep.subr.mxu0 0.0
    %1020 = vmatpush1.msra.mxu0 0.0
    %1021 = vmatprep.subr.mxu0 0.0
    %1022 = vmatpush1.msra.mxu0 0.0
    %1023 = vmatprep.subr.mxu0 0.0
    %1024 = vmatpush1.msra.mxu0 0.0
    %1025 = vmatprep.subr.mxu0 0.0
    %1026 = vmatpush1.msra.mxu0 0.0
    %1027 = vmatprep.subr.mxu0 0.0
    %1028 = vmatpush1.msra.mxu0 0.0
    %1029 = vmatprep.subr.mxu0 0.0
    %1030 = vmatpush1.msra.mxu0 0.0
    %1031 = vmatprep.subr.mxu0 0.0
    %1032 = vmatpush1.msra.mxu0 0.0
    %1033 = vmatprep.subr.mxu0 0.0
    %1034 = vmatpush1.msra.mxu0 0.0
    %1035 = vmatprep.subr.mxu0 0.0
    %1036 = vmatpush1.msra.mxu0 0.0
    %1037 = vmatprep.subr.mxu0 0.0
    %1038 = vmatpush1.msra.mxu0 0.0
    %1039 = vmatprep.subr.mxu0 0.0
    %1040 = vmatpush1.msra.mxu0 0.0
    %1041 = vmatprep.subr.mxu0 0.0
    %1042 = vmatpush1.msra.mxu0 0.0
    %1043 = vmatprep.subr.mxu0 0.0
    %1044 = vmatpush1.msra.mxu0 0.0
    %1045 = vmatprep.subr.mxu0 0.0
    %1046 = vmatpush1.msra.mxu0 0.0
    %1047 = vmatprep.subr.mxu0 0.0
    %1048 = vmatpush1.msra.mxu0 0.0
    %1049 = vmatprep.mubr.f32.mxu0 0.0
    %1050 = vmatmul.mubr.f32.gmra.mrb[0].mxu0 %v977
    %v1051 = vpop.f32.mrb[0].mxu0
    %v1052 = vadd.f32 %v974, %v1051
    %v1053 = vpop.f32.mrb[0].mxu0
    %v1054 = vadd.f32 %v974, %v1053
    %1055 = vdwg.mxu0
    %v1057 = vadd.f32 %v1052, %v27
    %v1058 = vadd.f32 %v1054, %v39
    %v1061 = vcombine.low %v1057, %v1058
    %1063 = vst [vmem:[#allocation2] sm:$0xff] %v1061
    %s1064 = scalar_lea.vmem %s0, 8
    %v1065 = vld [vmem:[%s1064] sm:$0xff]
    %v1067 = vcombine.high %v1065, %v1065
    %v1068 = vsel %vm47, %v1065, 0
    %v1070 = vsel %vm47, %v1067, 0
    %1072 = vmatprep.subr.mxu0 %v1070
    %1073 = vmatpush1.msra.mxu0 %v1068
    %1074 = vmatprep.subr.mxu0 0.0
    %1075 = vmatpush1.msra.mxu0 0.0
    %1076 = vmatprep.subr.mxu0 0.0
    %1077 = vmatpush1.msra.mxu0 0.0
    %1078 = vmatprep.subr.mxu0 0.0
    %1079 = vmatpush1.msra.mxu0 0.0
    %1080 = vmatprep.subr.mxu0 0.0
    %1081 = vmatpush1.msra.mxu0 0.0
    %1082 = vmatprep.subr.mxu0 0.0
    %1083 = vmatpush1.msra.mxu0 0.0
    %1084 = vmatprep.subr.mxu0 0.0
    %1085 = vmatpush1.msra.mxu0 0.0
    %1086 = vmatprep.subr.mxu0 0.0
    %1087 = vmatpush1.msra.mxu0 0.0
    %1088 = vmatprep.subr.mxu0 0.0
    %1089 = vmatpush1.msra.mxu0 0.0
    %1090 = vmatprep.subr.mxu0 0.0
    %1091 = vmatpush1.msra.mxu0 0.0
    %1092 = vmatprep.subr.mxu0 0.0
    %1093 = vmatpush1.msra.mxu0 0.0
    %1094 = vmatprep.subr.mxu0 0.0
    %1095 = vmatpush1.msra.mxu0 0.0
    %1096 = vmatprep.subr.mxu0 0.0
    %1097 = vmatpush1.msra.mxu0 0.0
    %1098 = vmatprep.subr.mxu0 0.0
    %1099 = vmatpush1.msra.mxu0 0.0
    %1100 = vmatprep.subr.mxu0 0.0
    %1101 = vmatpush1.msra.mxu0 0.0
    %1102 = vmatprep.subr.mxu0 0.0
    %1103 = vmatpush1.msra.mxu0 0.0
    %1104 = vmatprep.subr.mxu0 0.0
    %1105 = vmatpush1.msra.mxu0 0.0
    %1106 = vmatprep.subr.mxu0 0.0
    %1107 = vmatpush1.msra.mxu0 0.0
    %1108 = vmatprep.subr.mxu0 0.0
    %1109 = vmatpush1.msra.mxu0 0.0
    %1110 = vmatprep.subr.mxu0 0.0
    %1111 = vmatpush1.msra.mxu0 0.0
    %1112 = vmatprep.subr.mxu0 0.0
    %1113 = vmatpush1.msra.mxu0 0.0
    %1114 = vmatprep.subr.mxu0 0.0
    %1115 = vmatpush1.msra.mxu0 0.0
    %1116 = vmatprep.subr.mxu0 0.0
    %1117 = vmatpush1.msra.mxu0 0.0
    %1118 = vmatprep.subr.mxu0 0.0
    %1119 = vmatpush1.msra.mxu0 0.0
    %1120 = vmatprep.subr.mxu0 0.0
    %1121 = vmatpush1.msra.mxu0 0.0
    %1122 = vmatprep.subr.mxu0 0.0
    %1123 = vmatpush1.msra.mxu0 0.0
    %1124 = vmatprep.subr.mxu0 0.0
    %1125 = vmatpush1.msra.mxu0 0.0
    %1126 = vmatprep.subr.mxu0 0.0
    %1127 = vmatpush1.msra.mxu0 0.0
    %1128 = vmatprep.subr.mxu0 0.0
    %1129 = vmatpush1.msra.mxu0 0.0
    %1130 = vmatprep.subr.mxu0 0.0
    %1131 = vmatpush1.msra.mxu0 0.0
    %1132 = vmatprep.subr.mxu0 0.0
    %1133 = vmatpush1.msra.mxu0 0.0
    %1134 = vmatprep.subr.mxu0 0.0
    %1135 = vmatpush1.msra.mxu0 0.0
    %1136 = vmatprep.mubr.f32.mxu0 0.0
    %1137 = vmatmul.mubr.f32.gmra.mrb[0].mxu0 %v42
    %v1138 = vpop.f32.mrb[0].mxu0
    %v1139 = vadd.f32 %v31, %v1138
    %v1140 = vpop.f32.mrb[0].mxu0
    %v1141 = vadd.f32 %v31, %v1140
    %1142 = vmatprep.mubr.f32.mxu0 0.0
    %1143 = vmatmul.mubr.f32.gmra.mrb[0].mxu0 %v45
    %v1144 = vpop.f32.mrb[0].mxu0
    %v1145 = vadd.f32 %v36, %v1144
    %v1146 = vpop.f32.mrb[0].mxu0
    %v1147 = vadd.f32 %v36, %v1146
    %1148 = vdwg.mxu0
    %v1151 = vrot.slane %v1139, 4
    %v1152 = vrot.slane %v1141, 4
    %1155 = vxpose.xlu0.b32.start [1/16] %v1151, 128
    %1156 = vxpose.xlu0.b32.cont [2/16] 0.0, 128
    %1157 = vxpose.xlu0.b32.cont [3/16] 0.0, 128
    %1158 = vxpose.xlu0.b32.cont [4/16] 0.0, 128
    %1159 = vxpose.xlu0.b32.cont [5/16] 0.0, 128
    %1160 = vxpose.xlu0.b32.cont [6/16] 0.0, 128
    %1161 = vxpose.xlu0.b32.cont [7/16] 0.0, 128
    %1162 = vxpose.xlu0.b32.cont [8/16] 0.0, 128
    %1163 = vxpose.xlu0.b32.cont [9/16] 0.0, 128
    %1164 = vxpose.xlu0.b32.cont [10/16] 0.0, 128
    %1165 = vxpose.xlu0.b32.cont [11/16] 0.0, 128
    %1166 = vxpose.xlu0.b32.cont [12/16] 0.0, 128
    %1167 = vxpose.xlu0.b32.cont [13/16] 0.0, 128
    %1168 = vxpose.xlu0.b32.cont [14/16] 0.0, 128
    %1169 = vxpose.xlu0.b32.cont [15/16] 0.0, 128
    %1170 = vxpose.xlu0.b32.end [16/16] 0.0, 128
    %v1171 = vpop.trf.xlu0
    %v1172 = vpop.trf.xlu0
    %v1173 = vpop.trf.xlu0
    %v1174 = vpop.trf.xlu0
    %v1175 = vpop.trf.xlu0
    %v1176 = vpop.trf.xlu0
    %v1177 = vpop.trf.xlu0
    %v1178 = vpop.trf.xlu0
    %v1179 = vpop.trf.xlu0
    %v1180 = vpop.trf.xlu0
    %v1181 = vpop.trf.xlu0
    %v1182 = vpop.trf.xlu0
    %v1183 = vpop.trf.xlu0
    %v1184 = vpop.trf.xlu0
    %v1185 = vpop.trf.xlu0
    %v1186 = vpop.trf.xlu0
    %1187 = vxpose.xlu0.b32.start [1/16] %v1152, 128
    %1188 = vxpose.xlu0.b32.cont [2/16] 0.0, 128
    %1189 = vxpose.xlu0.b32.cont [3/16] 0.0, 128
    %1190 = vxpose.xlu0.b32.cont [4/16] 0.0, 128
    %1191 = vxpose.xlu0.b32.cont [5/16] 0.0, 128
    %1192 = vxpose.xlu0.b32.cont [6/16] 0.0, 128
    %1193 = vxpose.xlu0.b32.cont [7/16] 0.0, 128
    %1194 = vxpose.xlu0.b32.cont [8/16] 0.0, 128
    %1195 = vxpose.xlu0.b32.cont [9/16] 0.0, 128
    %1196 = vxpose.xlu0.b32.cont [10/16] 0.0, 128
    %1197 = vxpose.xlu0.b32.cont [11/16] 0.0, 128
    %1198 = vxpose.xlu0.b32.cont [12/16] 0.0, 128
    %1199 = vxpose.xlu0.b32.cont [13/16] 0.0, 128
    %1200 = vxpose.xlu0.b32.cont [14/16] 0.0, 128
    %1201 = vxpose.xlu0.b32.cont [15/16] 0.0, 128
    %1202 = vxpose.xlu0.b32.end [16/16] 0.0, 128
    %v1203 = vpop.trf.xlu0
    %v1204 = vpop.trf.xlu0
    %v1205 = vpop.trf.xlu0
    %v1206 = vpop.trf.xlu0
    %v1207 = vpop.trf.xlu0
    %v1208 = vpop.trf.xlu0
    %v1209 = vpop.trf.xlu0
    %v1210 = vpop.trf.xlu0
    %v1211 = vpop.trf.xlu0
    %v1212 = vpop.trf.xlu0
    %v1213 = vpop.trf.xlu0
    %v1214 = vpop.trf.xlu0
    %v1215 = vpop.trf.xlu0
    %v1216 = vpop.trf.xlu0
    %v1217 = vpop.trf.xlu0
    %v1218 = vpop.trf.xlu0
    %v1220 = vsel %vm40, %v1171, 0
    %v1223 = vsel %vm40, %v1172, 0
    %v1226 = vsel %vm40, %v1173, 0
    %v1229 = vsel %vm40, %v1174, 0
    %v1232 = vsel %vm40, %v1175, 0
    %v1235 = vsel %vm40, %v1176, 0
    %v1238 = vsel %vm40, %v1177, 0
    %v1241 = vsel %vm40, %v1178, 0
    %v1244 = vsel %vm40, %v1179, 0
    %v1247 = vsel %vm40, %v1180, 0
    %v1250 = vsel %vm40, %v1181, 0
    %v1253 = vsel %vm40, %v1182, 0
    %v1256 = vsel %vm40, %v1183, 0
    %v1259 = vsel %vm40, %v1184, 0
    %v1262 = vsel %vm40, %v1185, 0
    %v1265 = vsel %vm40, %v1186, 0
    %v1268 = vsel %vm40, %v1203, 0
    %v1271 = vsel %vm40, %v1204, 0
    %v1274 = vsel %vm40, %v1205, 0
    %v1277 = vsel %vm40, %v1206, 0
    %v1280 = vsel %vm40, %v1207, 0
    %v1283 = vsel %vm40, %v1208, 0
    %v1286 = vsel %vm40, %v1209, 0
    %v1289 = vsel %vm40, %v1210, 0
    %v1292 = vsel %vm40, %v1211, 0
    %v1295 = vsel %vm40, %v1212, 0
    %v1298 = vsel %vm40, %v1213, 0
    %v1301 = vsel %vm40, %v1214, 0
    %v1304 = vsel %vm40, %v1215, 0
    %v1307 = vsel %vm40, %v1216, 0
    %v1310 = vsel %vm40, %v1217, 0
    %v1313 = vsel %vm40, %v1218, 0
    %v1315 = vsel %vm47, %v1139, 0
    %v1317 = vsel %vm47, %v1141, 0
    %1319 = vmatprep.subr.mxu0 %v1317
    %1320 = vmatpush1.msra.mxu0 %v1315
    %1321 = vmatprep.subr.mxu0 0.0
    %1322 = vmatpush1.msra.mxu0 0.0
    %1323 = vmatprep.subr.mxu0 0.0
    %1324 = vmatpush1.msra.mxu0 0.0
    %1325 = vmatprep.subr.mxu0 0.0
    %1326 = vmatpush1.msra.mxu0 0.0
    %1327 = vmatprep.subr.mxu0 0.0
    %1328 = vmatpush1.msra.mxu0 0.0
    %1329 = vmatprep.subr.mxu0 0.0
    %1330 = vmatpush1.msra.mxu0 0.0
    %1331 = vmatprep.subr.mxu0 0.0
    %1332 = vmatpush1.msra.mxu0 0.0
    %1333 = vmatprep.subr.mxu0 0.0
    %1334 = vmatpush1.msra.mxu0 0.0
    %1335 = vmatprep.subr.mxu0 0.0
    %1336 = vmatpush1.msra.mxu0 0.0
    %1337 = vmatprep.subr.mxu0 0.0
    %1338 = vmatpush1.msra.mxu0 0.0
    %1339 = vmatprep.subr.mxu0 0.0
    %1340 = vmatpush1.msra.mxu0 0.0
    %1341 = vmatprep.subr.mxu0 0.0
    %1342 = vmatpush1.msra.mxu0 0.0
    %1343 = vmatprep.subr.mxu0 0.0
    %1344 = vmatpush1.msra.mxu0 0.0
    %1345 = vmatprep.subr.mxu0 0.0
    %1346 = vmatpush1.msra.mxu0 0.0
    %1347 = vmatprep.subr.mxu0 0.0
    %1348 = vmatpush1.msra.mxu0 0.0
    %1349 = vmatprep.subr.mxu0 0.0
    %1350 = vmatpush1.msra.mxu0 0.0
    %1351 = vmatprep.subr.mxu0 0.0
    %1352 = vmatpush1.msra.mxu0 0.0
    %1353 = vmatprep.subr.mxu0 0.0
    %1354 = vmatpush1.msra.mxu0 0.0
    %1355 = vmatprep.subr.mxu0 0.0
    %1356 = vmatpush1.msra.mxu0 0.0
    %1357 = vmatprep.subr.mxu0 0.0
    %1358 = vmatpush1.msra.mxu0 0.0
    %1359 = vmatprep.subr.mxu0 0.0
    %1360 = vmatpush1.msra.mxu0 0.0
    %1361 = vmatprep.subr.mxu0 0.0
    %1362 = vmatpush1.msra.mxu0 0.0
    %1363 = vmatprep.subr.mxu0 0.0
    %1364 = vmatpush1.msra.mxu0 0.0
    %1365 = vmatprep.subr.mxu0 0.0
    %1366 = vmatpush1.msra.mxu0 0.0
    %1367 = vmatprep.subr.mxu0 0.0
    %1368 = vmatpush1.msra.mxu0 0.0
    %1369 = vmatprep.subr.mxu0 0.0
    %1370 = vmatpush1.msra.mxu0 0.0
    %1371 = vmatprep.subr.mxu0 0.0
    %1372 = vmatpush1.msra.mxu0 0.0
    %1373 = vmatprep.subr.mxu0 0.0
    %1374 = vmatpush1.msra.mxu0 0.0
    %1375 = vmatprep.subr.mxu0 0.0
    %1376 = vmatpush1.msra.mxu0 0.0
    %1377 = vmatprep.subr.mxu0 0.0
    %1378 = vmatpush1.msra.mxu0 0.0
    %1379 = vmatprep.subr.mxu0 0.0
    %1380 = vmatpush1.msra.mxu0 0.0
    %1381 = vmatprep.subr.mxu0 0.0
    %1382 = vmatpush1.msra.mxu0 0.0
    %1383 = vmatprep.mubr.f32.mxu0 0.0
    %1384 = vmatmul.mubr.f32.gmra.mrb[0].mxu0 %v1220
    %v1385 = vpop.f32.mrb[0].mxu0
    %v1386 = vadd.f32 0.0, %v1385
    %v1387 = vpop.f32.mrb[0].mxu0
    %v1388 = vadd.f32 0.0, %v1387
    %1389 = vmatprep.mubr.f32.mxu0 0.0
    %1390 = vmatmul.mubr.f32.gmra.mrb[0].mxu0 %v1223
    %v1391 = vpop.f32.mrb[0].mxu0
    %v1392 = vadd.f32 0.0, %v1391
    %v1393 = vpop.f32.mrb[0].mxu0
    %v1394 = vadd.f32 0.0, %v1393
    %1395 = vmatprep.mubr.f32.mxu0 0.0
    %1396 = vmatmul.mubr.f32.gmra.mrb[0].mxu0 %v1226
    %v1397 = vpop.f32.mrb[0].mxu0
    %v1398 = vadd.f32 0.0, %v1397
    %v1399 = vpop.f32.mrb[0].mxu0
    %v1400 = vadd.f32 0.0, %v1399
    %1401 = vmatprep.mubr.f32.mxu0 0.0
    %1402 = vmatmul.mubr.f32.gmra.mrb[0].mxu0 %v1229
    %v1403 = vpop.f32.mrb[0].mxu0
    %v1404 = vadd.f32 0.0, %v1403
    %v1405 = vpop.f32.mrb[0].mxu0
    %v1406 = vadd.f32 0.0, %v1405
    %1407 = vmatprep.mubr.f32.mxu0 0.0
    %1408 = vmatmul.mubr.f32.gmra.mrb[0].mxu0 %v1232
    %v1409 = vpop.f32.mrb[0].mxu0
    %v1410 = vadd.f32 0.0, %v1409
    %v1411 = vpop.f32.mrb[0].mxu0
    %v1412 = vadd.f32 0.0, %v1411
    %1413 = vmatprep.mubr.f32.mxu0 0.0
    %1414 = vmatmul.mubr.f32.gmra.mrb[0].mxu0 %v1235
    %v1415 = vpop.f32.mrb[0].mxu0
    %v1416 = vadd.f32 0.0, %v1415
    %v1417 = vpop.f32.mrb[0].mxu0
    %v1418 = vadd.f32 0.0, %v1417
    %1419 = vmatprep.mubr.f32.mxu0 0.0
    %1420 = vmatmul.mubr.f32.gmra.mrb[0].mxu0 %v1238
    %v1421 = vpop.f32.mrb[0].mxu0
    %v1422 = vadd.f32 0.0, %v1421
    %v1423 = vpop.f32.mrb[0].mxu0
    %v1424 = vadd.f32 0.0, %v1423
    %1425 = vmatprep.mubr.f32.mxu0 0.0
    %1426 = vmatmul.mubr.f32.gmra.mrb[0].mxu0 %v1241
    %v1427 = vpop.f32.mrb[0].mxu0
    %v1428 = vadd.f32 0.0, %v1427
    %v1429 = vpop.f32.mrb[0].mxu0
    %v1430 = vadd.f32 0.0, %v1429
    %1431 = vmatprep.mubr.f32.mxu0 0.0
    %1432 = vmatmul.mubr.f32.gmra.mrb[0].mxu0 %v1244
    %v1433 = vpop.f32.mrb[0].mxu0
    %v1434 = vadd.f32 0.0, %v1433
    %v1435 = vpop.f32.mrb[0].mxu0
    %v1436 = vadd.f32 0.0, %v1435
    %1437 = vmatprep.mubr.f32.mxu0 0.0
    %1438 = vmatmul.mubr.f32.gmra.mrb[0].mxu0 %v1247
    %v1439 = vpop.f32.mrb[0].mxu0
    %v1440 = vadd.f32 0.0, %v1439
    %v1441 = vpop.f32.mrb[0].mxu0
    %v1442 = vadd.f32 0.0, %v1441
    %1443 = vmatprep.mubr.f32.mxu0 0.0
    %1444 = vmatmul.mubr.f32.gmra.mrb[0].mxu0 %v1250
    %v1445 = vpop.f32.mrb[0].mxu0
    %v1446 = vadd.f32 0.0, %v1445
    %v1447 = vpop.f32.mrb[0].mxu0
    %v1448 = vadd.f32 0.0, %v1447
    %1449 = vmatprep.mubr.f32.mxu0 0.0
    %1450 = vmatmul.mubr.f32.gmra.mrb[0].mxu0 %v1253
    %v1451 = vpop.f32.mrb[0].mxu0
    %v1452 = vadd.f32 0.0, %v1451
    %v1453 = vpop.f32.mrb[0].mxu0
    %v1454 = vadd.f32 0.0, %v1453
    %1455 = vmatprep.mubr.f32.mxu0 0.0
    %1456 = vmatmul.mubr.f32.gmra.mrb[0].mxu0 %v1256
    %v1457 = vpop.f32.mrb[0].mxu0
    %v1458 = vadd.f32 0.0, %v1457
    %v1459 = vpop.f32.mrb[0].mxu0
    %v1460 = vadd.f32 0.0, %v1459
    %1461 = vmatprep.mubr.f32.mxu0 0.0
    %1462 = vmatmul.mubr.f32.gmra.mrb[0].mxu0 %v1259
    %v1463 = vpop.f32.mrb[0].mxu0
    %v1464 = vadd.f32 0.0, %v1463
    %v1465 = vpop.f32.mrb[0].mxu0
    %v1466 = vadd.f32 0.0, %v1465
    %1467 = vmatprep.mubr.f32.mxu0 0.0
    %1468 = vmatmul.mubr.f32.gmra.mrb[0].mxu0 %v1262
    %v1469 = vpop.f32.mrb[0].mxu0
    %v1470 = vadd.f32 0.0, %v1469
    %v1471 = vpop.f32.mrb[0].mxu0
    %v1472 = vadd.f32 0.0, %v1471
    %1473 = vmatprep.mubr.f32.mxu0 0.0
    %1474 = vmatmul.mubr.f32.gmra.mrb[0].mxu0 %v1265
    %v1475 = vpop.f32.mrb[0].mxu0
    %v1476 = vadd.f32 0.0, %v1475
    %v1477 = vpop.f32.mrb[0].mxu0
    %v1478 = vadd.f32 0.0, %v1477
    %1479 = vmatprep.mubr.f32.mxu0 0.0
    %1480 = vmatmul.mubr.f32.gmra.mrb[0].mxu0 %v1268
    %v1481 = vpop.f32.mrb[0].mxu0
    %v1482 = vadd.f32 0.0, %v1481
    %v1483 = vpop.f32.mrb[0].mxu0
    %v1484 = vadd.f32 0.0, %v1483
    %1485 = vmatprep.mubr.f32.mxu0 0.0
    %1486 = vmatmul.mubr.f32.gmra.mrb[0].mxu0 %v1271
    %v1487 = vpop.f32.mrb[0].mxu0
    %v1488 = vadd.f32 0.0, %v1487
    %v1489 = vpop.f32.mrb[0].mxu0
    %v1490 = vadd.f32 0.0, %v1489
    %1491 = vmatprep.mubr.f32.mxu0 0.0
    %1492 = vmatmul.mubr.f32.gmra.mrb[0].mxu0 %v1274
    %v1493 = vpop.f32.mrb[0].mxu0
    %v1494 = vadd.f32 0.0, %v1493
    %v1495 = vpop.f32.mrb[0].mxu0
    %v1496 = vadd.f32 0.0, %v1495
    %1497 = vmatprep.mubr.f32.mxu0 0.0
    %1498 = vmatmul.mubr.f32.gmra.mrb[0].mxu0 %v1277
    %v1499 = vpop.f32.mrb[0].mxu0
    %v1500 = vadd.f32 0.0, %v1499
    %v1501 = vpop.f32.mrb[0].mxu0
    %v1502 = vadd.f32 0.0, %v1501
    %1503 = vmatprep.mubr.f32.mxu0 0.0
    %1504 = vmatmul.mubr.f32.gmra.mrb[0].mxu0 %v1280
    %v1505 = vpop.f32.mrb[0].mxu0
    %v1506 = vadd.f32 0.0, %v1505
    %v1507 = vpop.f32.mrb[0].mxu0
    %v1508 = vadd.f32 0.0, %v1507
    %1509 = vmatprep.mubr.f32.mxu0 0.0
    %1510 = vmatmul.mubr.f32.gmra.mrb[0].mxu0 %v1283
    %v1511 = vpop.f32.mrb[0].mxu0
    %v1512 = vadd.f32 0.0, %v1511
    %v1513 = vpop.f32.mrb[0].mxu0
    %v1514 = vadd.f32 0.0, %v1513
    %1515 = vmatprep.mubr.f32.mxu0 0.0
    %1516 = vmatmul.mubr.f32.gmra.mrb[0].mxu0 %v1286
    %v1517 = vpop.f32.mrb[0].mxu0
    %v1518 = vadd.f32 0.0, %v1517
    %v1519 = vpop.f32.mrb[0].mxu0
    %v1520 = vadd.f32 0.0, %v1519
    %1521 = vmatprep.mubr.f32.mxu0 0.0
    %1522 = vmatmul.mubr.f32.gmra.mrb[0].mxu0 %v1289
    %v1523 = vpop.f32.mrb[0].mxu0
    %v1524 = vadd.f32 0.0, %v1523
    %v1525 = vpop.f32.mrb[0].mxu0
    %v1526 = vadd.f32 0.0, %v1525
    %1527 = vmatprep.mubr.f32.mxu0 0.0
    %1528 = vmatmul.mubr.f32.gmra.mrb[0].mxu0 %v1292
    %v1529 = vpop.f32.mrb[0].mxu0
    %v1530 = vadd.f32 0.0, %v1529
    %v1531 = vpop.f32.mrb[0].mxu0
    %v1532 = vadd.f32 0.0, %v1531
    %1533 = vmatprep.mubr.f32.mxu0 0.0
    %1534 = vmatmul.mubr.f32.gmra.mrb[0].mxu0 %v1295
    %v1535 = vpop.f32.mrb[0].mxu0
    %v1536 = vadd.f32 0.0, %v1535
    %v1537 = vpop.f32.mrb[0].mxu0
    %v1538 = vadd.f32 0.0, %v1537
    %1539 = vmatprep.mubr.f32.mxu0 0.0
    %1540 = vmatmul.mubr.f32.gmra.mrb[0].mxu0 %v1298
    %v1541 = vpop.f32.mrb[0].mxu0
    %v1542 = vadd.f32 0.0, %v1541
    %v1543 = vpop.f32.mrb[0].mxu0
    %v1544 = vadd.f32 0.0, %v1543
    %1545 = vmatprep.mubr.f32.mxu0 0.0
    %1546 = vmatmul.mubr.f32.gmra.mrb[0].mxu0 %v1301
    %v1547 = vpop.f32.mrb[0].mxu0
    %v1548 = vadd.f32 0.0, %v1547
    %v1549 = vpop.f32.mrb[0].mxu0
    %v1550 = vadd.f32 0.0, %v1549
    %1551 = vmatprep.mubr.f32.mxu0 0.0
    %1552 = vmatmul.mubr.f32.gmra.mrb[0].mxu0 %v1304
    %v1553 = vpop.f32.mrb[0].mxu0
    %v1554 = vadd.f32 0.0, %v1553
    %v1555 = vpop.f32.mrb[0].mxu0
    %v1556 = vadd.f32 0.0, %v1555
    %1557 = vmatprep.mubr.f32.mxu0 0.0
    %1558 = vmatmul.mubr.f32.gmra.mrb[0].mxu0 %v1307
    %v1559 = vpop.f32.mrb[0].mxu0
    %v1560 = vadd.f32 0.0, %v1559
    %v1561 = vpop.f32.mrb[0].mxu0
    %v1562 = vadd.f32 0.0, %v1561
    %1563 = vmatprep.mubr.f32.mxu0 0.0
    %1564 = vmatmul.mubr.f32.gmra.mrb[0].mxu0 %v1310
    %v1565 = vpop.f32.mrb[0].mxu0
    %v1566 = vadd.f32 0.0, %v1565
    %v1567 = vpop.f32.mrb[0].mxu0
    %v1568 = vadd.f32 0.0, %v1567
    %1569 = vmatprep.mubr.f32.mxu0 0.0
    %1570 = vmatmul.mubr.f32.gmra.mrb[0].mxu0 %v1313
    %v1571 = vpop.f32.mrb[0].mxu0
    %v1572 = vadd.f32 0.0, %v1571
    %v1573 = vpop.f32.mrb[0].mxu0
    %v1574 = vadd.f32 0.0, %v1573
    %1575 = vdwg.mxu0
    %v1576 = vmax.f32 %v1386, %v1398
    %v1577 = vmax.f32 %v1392, %v1404
    %v1578 = vmax.f32 %v1576, %v1410
    %v1579 = vmax.f32 %v1577, %v1416
    %v1580 = vmax.f32 %v1578, %v1422
    %v1581 = vmax.f32 %v1579, %v1428
    %v1582 = vmax.f32 %v1580, %v1434
    %v1583 = vmax.f32 %v1581, %v1440
    %v1584 = vmax.f32 %v1582, %v1446
    %v1585 = vmax.f32 %v1583, %v1452
    %v1586 = vmax.f32 %v1584, %v1458
    %v1587 = vmax.f32 %v1585, %v1464
    %v1588 = vmax.f32 %v1586, %v1470
    %v1589 = vmax.f32 %v1587, %v1476
    %v1590 = vmax.f32 %v1588, %v1482
    %v1591 = vmax.f32 %v1589, %v1488
    %v1592 = vmax.f32 %v1590, %v1494
    %v1593 = vmax.f32 %v1591, %v1500
    %v1594 = vmax.f32 %v1592, %v1506
    %v1595 = vmax.f32 %v1593, %v1512
    %v1596 = vmax.f32 %v1594, %v1518
    %v1597 = vmax.f32 %v1595, %v1524
    %v1598 = vmax.f32 %v1596, %v1530
    %v1599 = vmax.f32 %v1597, %v1536
    %v1600 = vmax.f32 %v1598, %v1542
    %v1601 = vmax.f32 %v1599, %v1548
    %v1602 = vmax.f32 %v1600, %v1554
    %v1603 = vmax.f32 %v1601, %v1560
    %v1604 = vmax.f32 %v1602, %v1566
    %v1605 = vmax.f32 %v1603, %v1572
    %v1606 = vmax.f32 %v1604, %v1605
    %v1607 = vrot.slane %v1606, 4
    %v1608 = vmax.f32 %v1606, %v1607
    %v1609 = vrot.slane %v1608, 2
    %v1610 = vmax.f32 %v1608, %v1609
    %v1611 = vrot.slane %v1610, 1
    %v1612 = vmax.f32 %v1610, %v1611
    %v1613 = vmax.f32 %v1388, %v1400
    %v1614 = vmax.f32 %v1394, %v1406
    %v1615 = vmax.f32 %v1613, %v1412
    %v1616 = vmax.f32 %v1614, %v1418
    %v1617 = vmax.f32 %v1615, %v1424
    %v1618 = vmax.f32 %v1616, %v1430
    %v1619 = vmax.f32 %v1617, %v1436
    %v1620 = vmax.f32 %v1618, %v1442
    %v1621 = vmax.f32 %v1619, %v1448
    %v1622 = vmax.f32 %v1620, %v1454
    %v1623 = vmax.f32 %v1621, %v1460
    %v1624 = vmax.f32 %v1622, %v1466
    %v1625 = vmax.f32 %v1623, %v1472
    %v1626 = vmax.f32 %v1624, %v1478
    %v1627 = vmax.f32 %v1625, %v1484
    %v1628 = vmax.f32 %v1626, %v1490
    %v1629 = vmax.f32 %v1627, %v1496
    %v1630 = vmax.f32 %v1628, %v1502
    %v1631 = vmax.f32 %v1629, %v1508
    %v1632 = vmax.f32 %v1630, %v1514
    %v1633 = vmax.f32 %v1631, %v1520
    %v1634 = vmax.f32 %v1632, %v1526
    %v1635 = vmax.f32 %v1633, %v1532
    %v1636 = vmax.f32 %v1634, %v1538
    %v1637 = vmax.f32 %v1635, %v1544
    %v1638 = vmax.f32 %v1636, %v1550
    %v1639 = vmax.f32 %v1637, %v1556
    %v1640 = vmax.f32 %v1638, %v1562
    %v1641 = vmax.f32 %v1639, %v1568
    %v1642 = vmax.f32 %v1640, %v1574
    %v1643 = vmax.f32 %v1641, %v1642
    %v1644 = vrot.slane %v1643, 4
    %v1645 = vmax.f32 %v1643, %v1644
    %v1646 = vrot.slane %v1645, 2
    %v1647 = vmax.f32 %v1645, %v1646
    %v1648 = vrot.slane %v1647, 1
    %v1649 = vmax.f32 %v1647, %v1648
    %v1650 = vsub.f32 %v1386, %v1612
    %v1651 = vsub.f32 %v1388, %v1649
    %v1652 = vsub.f32 %v1392, %v1612
    %v1653 = vsub.f32 %v1394, %v1649
    %v1654 = vsub.f32 %v1398, %v1612
    %v1655 = vsub.f32 %v1400, %v1649
    %v1656 = vsub.f32 %v1404, %v1612
    %v1657 = vsub.f32 %v1406, %v1649
    %v1658 = vsub.f32 %v1410, %v1612
    %v1659 = vsub.f32 %v1412, %v1649
    %v1660 = vsub.f32 %v1416, %v1612
    %v1661 = vsub.f32 %v1418, %v1649
    %v1662 = vsub.f32 %v1422, %v1612
    %v1663 = vsub.f32 %v1424, %v1649
    %v1664 = vsub.f32 %v1428, %v1612
    %v1665 = vsub.f32 %v1430, %v1649
    %v1666 = vsub.f32 %v1434, %v1612
    %v1667 = vsub.f32 %v1436, %v1649
    %v1668 = vsub.f32 %v1440, %v1612
    %v1669 = vsub.f32 %v1442, %v1649
    %v1670 = vsub.f32 %v1446, %v1612
    %v1671 = vsub.f32 %v1448, %v1649
    %v1672 = vsub.f32 %v1452, %v1612
    %v1673 = vsub.f32 %v1454, %v1649
    %v1674 = vsub.f32 %v1458, %v1612
    %v1675 = vsub.f32 %v1460, %v1649
    %v1676 = vsub.f32 %v1464, %v1612
    %v1677 = vsub.f32 %v1466, %v1649
    %v1678 = vsub.f32 %v1470, %v1612
    %v1679 = vsub.f32 %v1472, %v1649
    %v1680 = vsub.f32 %v1476, %v1612
    %v1681 = vsub.f32 %v1478, %v1649
    %v1682 = vsub.f32 %v1482, %v1612
    %v1683 = vsub.f32 %v1484, %v1649
    %v1684 = vsub.f32 %v1488, %v1612
    %v1685 = vsub.f32 %v1490, %v1649
    %v1686 = vsub.f32 %v1494, %v1612
    %v1687 = vsub.f32 %v1496, %v1649
    %v1688 = vsub.f32 %v1500, %v1612
    %v1689 = vsub.f32 %v1502, %v1649
    %v1690 = vsub.f32 %v1506, %v1612
    %v1691 = vsub.f32 %v1508, %v1649
    %v1692 = vsub.f32 %v1512, %v1612
    %v1693 = vsub.f32 %v1514, %v1649
    %v1694 = vsub.f32 %v1518, %v1612
    %v1695 = vsub.f32 %v1520, %v1649
    %v1696 = vsub.f32 %v1524, %v1612
    %v1697 = vsub.f32 %v1526, %v1649
    %v1698 = vsub.f32 %v1530, %v1612
    %v1699 = vsub.f32 %v1532, %v1649
    %v1700 = vsub.f32 %v1536, %v1612
    %v1701 = vsub.f32 %v1538, %v1649
    %v1702 = vsub.f32 %v1542, %v1612
    %v1703 = vsub.f32 %v1544, %v1649
    %v1704 = vsub.f32 %v1548, %v1612
    %v1705 = vsub.f32 %v1550, %v1649
    %v1706 = vsub.f32 %v1554, %v1612
    %v1707 = vsub.f32 %v1556, %v1649
    %v1708 = vsub.f32 %v1560, %v1612
    %v1709 = vsub.f32 %v1562, %v1649
    %v1710 = vsub.f32 %v1566, %v1612
    %v1711 = vsub.f32 %v1568, %v1649
    %v1712 = vsub.f32 %v1572, %v1612
    %v1713 = vsub.f32 %v1574, %v1649
    %v1714 = vmul.f32 %v1650, 1.442695
    %v1715 = vpow.pop %v1714
    %v1716 = vmul.f32 %v1651, 1.442695
    %v1717 = vpow.pop %v1716
    %v1718 = vmul.f32 %v1652, 1.442695
    %v1719 = vpow.pop %v1718
    %v1720 = vmul.f32 %v1653, 1.442695
    %v1721 = vpow.pop %v1720
    %v1722 = vmul.f32 %v1654, 1.442695
    %v1723 = vpow.pop %v1722
    %v1724 = vmul.f32 %v1655, 1.442695
    %v1725 = vpow.pop %v1724
    %v1726 = vmul.f32 %v1656, 1.442695
    %v1727 = vpow.pop %v1726
    %v1728 = vmul.f32 %v1657, 1.442695
    %v1729 = vpow.pop %v1728
    %v1730 = vmul.f32 %v1658, 1.442695
    %v1731 = vpow.pop %v1730
    %v1732 = vmul.f32 %v1659, 1.442695
    %v1733 = vpow.pop %v1732
    %v1734 = vmul.f32 %v1660, 1.442695
    %v1735 = vpow.pop %v1734
    %v1736 = vmul.f32 %v1661, 1.442695
    %v1737 = vpow.pop %v1736
    %v1738 = vmul.f32 %v1662, 1.442695
    %v1739 = vpow.pop %v1738
    %v1740 = vmul.f32 %v1663, 1.442695
    %v1741 = vpow.pop %v1740
    %v1742 = vmul.f32 %v1664, 1.442695
    %v1743 = vpow.pop %v1742
    %v1744 = vmul.f32 %v1665, 1.442695
    %v1745 = vpow.pop %v1744
    %v1746 = vmul.f32 %v1666, 1.442695
    %v1747 = vpow.pop %v1746
    %v1748 = vmul.f32 %v1667, 1.442695
    %v1749 = vpow.pop %v1748
    %v1750 = vmul.f32 %v1668, 1.442695
    %v1751 = vpow.pop %v1750
    %v1752 = vmul.f32 %v1669, 1.442695
    %v1753 = vpow.pop %v1752
    %v1754 = vmul.f32 %v1670, 1.442695
    %v1755 = vpow.pop %v1754
    %v1756 = vmul.f32 %v1671, 1.442695
    %v1757 = vpow.pop %v1756
    %v1758 = vmul.f32 %v1672, 1.442695
    %v1759 = vpow.pop %v1758
    %v1760 = vmul.f32 %v1673, 1.442695
    %v1761 = vpow.pop %v1760
    %v1762 = vmul.f32 %v1674, 1.442695
    %v1763 = vpow.pop %v1762
    %v1764 = vmul.f32 %v1675, 1.442695
    %v1765 = vpow.pop %v1764
    %v1766 = vmul.f32 %v1676, 1.442695
    %v1767 = vpow.pop %v1766
    %v1768 = vmul.f32 %v1677, 1.442695
    %v1769 = vpow.pop %v1768
    %v1770 = vmul.f32 %v1678, 1.442695
    %v1771 = vpow.pop %v1770
    %v1772 = vmul.f32 %v1679, 1.442695
    %v1773 = vpow.pop %v1772
    %v1774 = vmul.f32 %v1680, 1.442695
    %v1775 = vpow.pop %v1774
    %v1776 = vmul.f32 %v1681, 1.442695
    %v1777 = vpow.pop %v1776
    %v1778 = vmul.f32 %v1682, 1.442695
    %v1779 = vpow.pop %v1778
    %v1780 = vmul.f32 %v1683, 1.442695
    %v1781 = vpow.pop %v1780
    %v1782 = vmul.f32 %v1684, 1.442695
    %v1783 = vpow.pop %v1782
    %v1784 = vmul.f32 %v1685, 1.442695
    %v1785 = vpow.pop %v1784
    %v1786 = vmul.f32 %v1686, 1.442695
    %v1787 = vpow.pop %v1786
    %v1788 = vmul.f32 %v1687, 1.442695
    %v1789 = vpow.pop %v1788
    %v1790 = vmul.f32 %v1688, 1.442695
    %v1791 = vpow.pop %v1790
    %v1792 = vmul.f32 %v1689, 1.442695
    %v1793 = vpow.pop %v1792
    %v1794 = vmul.f32 %v1690, 1.442695
    %v1795 = vpow.pop %v1794
    %v1796 = vmul.f32 %v1691, 1.442695
    %v1797 = vpow.pop %v1796
    %v1798 = vmul.f32 %v1692, 1.442695
    %v1799 = vpow.pop %v1798
    %v1800 = vmul.f32 %v1693, 1.442695
    %v1801 = vpow.pop %v1800
    %v1802 = vmul.f32 %v1694, 1.442695
    %v1803 = vpow.pop %v1802
    %v1804 = vmul.f32 %v1695, 1.442695
    %v1805 = vpow.pop %v1804
    %v1806 = vmul.f32 %v1696, 1.442695
    %v1807 = vpow.pop %v1806
    %v1808 = vmul.f32 %v1697, 1.442695
    %v1809 = vpow.pop %v1808
    %v1810 = vmul.f32 %v1698, 1.442695
    %v1811 = vpow.pop %v1810
    %v1812 = vmul.f32 %v1699, 1.442695
    %v1813 = vpow.pop %v1812
    %v1814 = vmul.f32 %v1700, 1.442695
    %v1815 = vpow.pop %v1814
    %v1816 = vmul.f32 %v1701, 1.442695
    %v1817 = vpow.pop %v1816
    %v1818 = vmul.f32 %v1702, 1.442695
    %v1819 = vpow.pop %v1818
    %v1820 = vmul.f32 %v1703, 1.442695
    %v1821 = vpow.pop %v1820
    %v1822 = vmul.f32 %v1704, 1.442695
    %v1823 = vpow.pop %v1822
    %v1824 = vmul.f32 %v1705, 1.442695
    %v1825 = vpow.pop %v1824
    %v1826 = vmul.f32 %v1706, 1.442695
    %v1827 = vpow.pop %v1826
    %v1828 = vmul.f32 %v1707, 1.442695
    %v1829 = vpow.pop %v1828
    %v1830 = vmul.f32 %v1708, 1.442695
    %v1831 = vpow.pop %v1830
    %v1832 = vmul.f32 %v1709, 1.442695
    %v1833 = vpow.pop %v1832
    %v1834 = vmul.f32 %v1710, 1.442695
    %v1835 = vpow.pop %v1834
    %v1836 = vmul.f32 %v1711, 1.442695
    %v1837 = vpow.pop %v1836
    %v1838 = vmul.f32 %v1712, 1.442695
    %v1839 = vpow.pop %v1838
    %v1840 = vmul.f32 %v1713, 1.442695
    %v1841 = vpow.pop %v1840
    %v1842 = vadd.f32 %v1715, %v1719
    %v1843 = vadd.f32 %v1842, %v1723
    %v1844 = vadd.f32 %v1843, %v1727
    %v1845 = vadd.f32 %v1844, %v1731
    %v1846 = vadd.f32 %v1845, %v1735
    %v1847 = vadd.f32 %v1846, %v1739
    %v1848 = vadd.f32 %v1847, %v1743
    %v1849 = vadd.f32 %v1848, %v1747
    %v1850 = vadd.f32 %v1849, %v1751
    %v1851 = vadd.f32 %v1850, %v1755
    %v1852 = vadd.f32 %v1851, %v1759
    %v1853 = vadd.f32 %v1852, %v1763
    %v1854 = vadd.f32 %v1853, %v1767
    %v1855 = vadd.f32 %v1854, %v1771
    %v1856 = vadd.f32 %v1855, %v1775
    %v1857 = vadd.f32 %v1856, %v1779
    %v1858 = vadd.f32 %v1857, %v1783
    %v1859 = vadd.f32 %v1858, %v1787
    %v1860 = vadd.f32 %v1859, %v1791
    %v1861 = vadd.f32 %v1860, %v1795
    %v1862 = vadd.f32 %v1861, %v1799
    %v1863 = vadd.f32 %v1862, %v1803
    %v1864 = vadd.f32 %v1863, %v1807
    %v1865 = vadd.f32 %v1864, %v1811
    %v1866 = vadd.f32 %v1865, %v1815
    %v1867 = vadd.f32 %v1866, %v1819
    %v1868 = vadd.f32 %v1867, %v1823
    %v1869 = vadd.f32 %v1868, %v1827
    %v1870 = vadd.f32 %v1869, %v1831
    %v1871 = vadd.f32 %v1870, %v1835
    %v1872 = vadd.f32 %v1871, %v1839
    %v1873 = vrot.slane %v1872, 4
    %v1874 = vadd.f32 %v1872, %v1873
    %v1875 = vrot.slane %v1874, 2
    %v1876 = vadd.f32 %v1874, %v1875
    %v1877 = vrot.slane %v1876, 1
    %v1878 = vadd.f32 %v1876, %v1877
    %v1879 = vadd.f32 %v1717, %v1721
    %v1880 = vadd.f32 %v1879, %v1725
    %v1881 = vadd.f32 %v1880, %v1729
    %v1882 = vadd.f32 %v1881, %v1733
    %v1883 = vadd.f32 %v1882, %v1737
    %v1884 = vadd.f32 %v1883, %v1741
    %v1885 = vadd.f32 %v1884, %v1745
    %v1886 = vadd.f32 %v1885, %v1749
    %v1887 = vadd.f32 %v1886, %v1753
    %v1888 = vadd.f32 %v1887, %v1757
    %v1889 = vadd.f32 %v1888, %v1761
    %v1890 = vadd.f32 %v1889, %v1765
    %v1891 = vadd.f32 %v1890, %v1769
    %v1892 = vadd.f32 %v1891, %v1773
    %v1893 = vadd.f32 %v1892, %v1777
    %v1894 = vadd.f32 %v1893, %v1781
    %v1895 = vadd.f32 %v1894, %v1785
    %v1896 = vadd.f32 %v1895, %v1789
    %v1897 = vadd.f32 %v1896, %v1793
    %v1898 = vadd.f32 %v1897, %v1797
    %v1899 = vadd.f32 %v1898, %v1801
    %v1900 = vadd.f32 %v1899, %v1805
    %v1901 = vadd.f32 %v1900, %v1809
    %v1902 = vadd.f32 %v1901, %v1813
    %v1903 = vadd.f32 %v1902, %v1817
    %v1904 = vadd.f32 %v1903, %v1821
    %v1905 = vadd.f32 %v1904, %v1825
    %v1906 = vadd.f32 %v1905, %v1829
    %v1907 = vadd.f32 %v1906, %v1833
    %v1908 = vadd.f32 %v1907, %v1837
    %v1909 = vadd.f32 %v1908, %v1841
    %v1910 = vrot.slane %v1909, 4
    %v1911 = vadd.f32 %v1909, %v1910
    %v1912 = vrot.slane %v1911, 2
    %v1913 = vadd.f32 %v1911, %v1912
    %v1914 = vrot.slane %v1913, 1
    %v1915 = vadd.f32 %v1913, %v1914
    %1916 = vmatprep.subr.mxu0 %v1717
    %1917 = vmatpush1.msra.mxu0 %v1715
    %1918 = vmatprep.subr.mxu0 %v1721
    %1919 = vmatpush1.msra.mxu0 %v1719
    %1920 = vmatprep.subr.mxu0 %v1725
    %1921 = vmatpush1.msra.mxu0 %v1723
    %1922 = vmatprep.subr.mxu0 %v1729
    %1923 = vmatpush1.msra.mxu0 %v1727
    %1924 = vmatprep.subr.mxu0 %v1733
    %1925 = vmatpush1.msra.mxu0 %v1731
    %1926 = vmatprep.subr.mxu0 %v1737
    %1927 = vmatpush1.msra.mxu0 %v1735
    %1928 = vmatprep.subr.mxu0 %v1741
    %1929 = vmatpush1.msra.mxu0 %v1739
    %1930 = vmatprep.subr.mxu0 %v1745
    %1931 = vmatpush1.msra.mxu0 %v1743
    %1932 = vmatprep.subr.mxu0 %v1749
    %1933 = vmatpush1.msra.mxu0 %v1747
    %1934 = vmatprep.subr.mxu0 %v1753
    %1935 = vmatpush1.msra.mxu0 %v1751
    %1936 = vmatprep.subr.mxu0 %v1757
    %1937 = vmatpush1.msra.mxu0 %v1755
    %1938 = vmatprep.subr.mxu0 %v1761
    %1939 = vmatpush1.msra.mxu0 %v1759
    %1940 = vmatprep.subr.mxu0 %v1765
    %1941 = vmatpush1.msra.mxu0 %v1763
    %1942 = vmatprep.subr.mxu0 %v1769
    %1943 = vmatpush1.msra.mxu0 %v1767
    %1944 = vmatprep.subr.mxu0 %v1773
    %1945 = vmatpush1.msra.mxu0 %v1771
    %1946 = vmatprep.subr.mxu0 %v1777
    %1947 = vmatpush1.msra.mxu0 %v1775
    %1948 = vmatprep.subr.mxu0 %v1781
    %1949 = vmatpush1.msra.mxu0 %v1779
    %1950 = vmatprep.subr.mxu0 %v1785
    %1951 = vmatpush1.msra.mxu0 %v1783
    %1952 = vmatprep.subr.mxu0 %v1789
    %1953 = vmatpush1.msra.mxu0 %v1787
    %1954 = vmatprep.subr.mxu0 %v1793
    %1955 = vmatpush1.msra.mxu0 %v1791
    %1956 = vmatprep.subr.mxu0 %v1797
    %1957 = vmatpush1.msra.mxu0 %v1795
    %1958 = vmatprep.subr.mxu0 %v1801
    %1959 = vmatpush1.msra.mxu0 %v1799
    %1960 = vmatprep.subr.mxu0 %v1805
    %1961 = vmatpush1.msra.mxu0 %v1803
    %1962 = vmatprep.subr.mxu0 %v1809
    %1963 = vmatpush1.msra.mxu0 %v1807
    %1964 = vmatprep.subr.mxu0 %v1813
    %1965 = vmatpush1.msra.mxu0 %v1811
    %1966 = vmatprep.subr.mxu0 %v1817
    %1967 = vmatpush1.msra.mxu0 %v1815
    %1968 = vmatprep.subr.mxu0 %v1821
    %1969 = vmatpush1.msra.mxu0 %v1819
    %1970 = vmatprep.subr.mxu0 %v1825
    %1971 = vmatpush1.msra.mxu0 %v1823
    %1972 = vmatprep.subr.mxu0 %v1829
    %1973 = vmatpush1.msra.mxu0 %v1827
    %1974 = vmatprep.subr.mxu0 %v1833
    %1975 = vmatpush1.msra.mxu0 %v1831
    %1976 = vmatprep.subr.mxu0 %v1837
    %1977 = vmatpush1.msra.mxu0 %v1835
    %1978 = vmatprep.subr.mxu0 %v1841
    %1979 = vmatpush1.msra.mxu0 %v1839
    %1980 = vmatprep.mubr.f32.mxu0 %v1147
    %1981 = vmatmul.mubr.f32.gmra.mrb[0].mxu0 %v1145
    %v1982 = vpop.f32.mrb[0].mxu0
    %v1983 = vadd.f32 0.0, %v1982
    %v1984 = vpop.f32.mrb[0].mxu0
    %v1985 = vadd.f32 0.0, %v1984
    %1986 = vdwg.mxu0
    %v1987 = vrcp.pop %v1878
    %v1988 = vrcp.pop %v1915
    %v1989 = vmul.f32 %v1983, %v1987
    %v1990 = vmul.f32 %v1985, %v1988
    %v1992 = vsel %vm47, %v1989, 0
    %v1995 = vsel %vm47, %v1990, 0
    %1997 = vmatprep.subr.mxu0 %v1995
    %1998 = vmatpush1.msra.mxu0 %v1992
    %1999 = vmatprep.subr.mxu0 0.0
    %2000 = vmatpush1.msra.mxu0 0.0
    %2001 = vmatprep.subr.mxu0 0.0
    %2002 = vmatpush1.msra.mxu0 0.0
    %2003 = vmatprep.subr.mxu0 0.0
    %2004 = vmatpush1.msra.mxu0 0.0
    %2005 = vmatprep.subr.mxu0 0.0
    %2006 = vmatpush1.msra.mxu0 0.0
    %2007 = vmatprep.subr.mxu0 0.0
    %2008 = vmatpush1.msra.mxu0 0.0
    %2009 = vmatprep.subr.mxu0 0.0
    %2010 = vmatpush1.msra.mxu0 0.0
    %2011 = vmatprep.subr.mxu0 0.0
    %2012 = vmatpush1.msra.mxu0 0.0
    %2013 = vmatprep.subr.mxu0 0.0
    %2014 = vmatpush1.msra.mxu0 0.0
    %2015 = vmatprep.subr.mxu0 0.0
    %2016 = vmatpush1.msra.mxu0 0.0
    %2017 = vmatprep.subr.mxu0 0.0
    %2018 = vmatpush1.msra.mxu0 0.0
    %2019 = vmatprep.subr.mxu0 0.0
    %2020 = vmatpush1.msra.mxu0 0.0
    %2021 = vmatprep.subr.mxu0 0.0
    %2022 = vmatpush1.msra.mxu0 0.0
    %2023 = vmatprep.subr.mxu0 0.0
    %2024 = vmatpush1.msra.mxu0 0.0
    %2025 = vmatprep.subr.mxu0 0.0
    %2026 = vmatpush1.msra.mxu0 0.0
    %2027 = vmatprep.subr.mxu0 0.0
    %2028 = vmatpush1.msra.mxu0 0.0
    %2029 = vmatprep.subr.mxu0 0.0
    %2030 = vmatpush1.msra.mxu0 0.0
    %2031 = vmatprep.subr.mxu0 0.0
    %2032 = vmatpush1.msra.mxu0 0.0
    %2033 = vmatprep.subr.mxu0 0.0
    %2034 = vmatpush1.msra.mxu0 0.0
    %2035 = vmatprep.subr.mxu0 0.0
    %2036 = vmatpush1.msra.mxu0 0.0
    %2037 = vmatprep.subr.mxu0 0.0
    %2038 = vmatpush1.msra.mxu0 0.0
    %2039 = vmatprep.subr.mxu0 0.0
    %2040 = vmatpush1.msra.mxu0 0.0
    %2041 = vmatprep.subr.mxu0 0.0
    %2042 = vmatpush1.msra.mxu0 0.0
    %2043 = vmatprep.subr.mxu0 0.0
    %2044 = vmatpush1.msra.mxu0 0.0
    %2045 = vmatprep.subr.mxu0 0.0
    %2046 = vmatpush1.msra.mxu0 0.0
    %2047 = vmatprep.subr.mxu0 0.0
    %2048 = vmatpush1.msra.mxu0 0.0
    %2049 = vmatprep.subr.mxu0 0.0
    %2050 = vmatpush1.msra.mxu0 0.0
    %2051 = vmatprep.subr.mxu0 0.0
    %2052 = vmatpush1.msra.mxu0 0.0
    %2053 = vmatprep.subr.mxu0 0.0
    %2054 = vmatpush1.msra.mxu0 0.0
    %2055 = vmatprep.subr.mxu0 0.0
    %2056 = vmatpush1.msra.mxu0 0.0
    %2057 = vmatprep.subr.mxu0 0.0
    %2058 = vmatpush1.msra.mxu0 0.0
    %2059 = vmatprep.subr.mxu0 0.0
    %2060 = vmatpush1.msra.mxu0 0.0
    %2061 = vmatprep.mubr.f32.mxu0 0.0
    %2062 = vmatmul.mubr.f32.gmra.mrb[0].mxu0 %v977
    %v2063 = vpop.f32.mrb[0].mxu0
    %v2064 = vadd.f32 %v974, %v2063
    %v2065 = vpop.f32.mrb[0].mxu0
    %v2066 = vadd.f32 %v974, %v2065
    %2067 = vdwg.mxu0
    %v2069 = vadd.f32 %v2064, %v1065
    %v2070 = vadd.f32 %v2066, %v1067
    %v2073 = vcombine.low %v2069, %v2070
    %s2075 = scalar_lea.vmem [#allocation2], 8
    %2076 = vst [vmem:[%s2075] sm:$0xff] %v2073
    // Predicated region
    $region22: #{tpu_custom_call.1} parent=1 // pred_check
      _
    $region23: #{tpu_custom_call.1} parent=1 // pred_check_branch
      %2078 = sbr.rel (0) target = $region25
    $region24: #{tpu_custom_call.1} parent=1 // pred_region
      %s2080 = ssub.s32 256, 256
      %2081 = vsyncadd [#allocation3], %s2080
      %s2082 = sshll.u32 [#allocation2], 4
      %s2083 = int_to_ptr.vmem [resolvable:$true] %s2082
      %2088 = dma.vmem_to_hbm [thread:$0]  %s2083, 256, %s5, [#allocation3], 128, 128, 8
    $region25: #{tpu_custom_call.1} parent=1 // pred_fallthru
      _
    // Predicated region
    $region26: #{tpu_custom_call.1} parent=1 // pred_check
      _
    $region27: #{tpu_custom_call.1} parent=1 // pred_check_branch
      %2090 = sbr.rel (0) target = $region29
    $region28: #{tpu_custom_call.1} parent=1 // pred_region
      %2091 = dma.done [#allocation3], 256
    $region29: #{tpu_custom_call.1} parent=1 // pred_fallthru
      _
    %2092 = vsyncpa [#allocation3], 1

</llo_original>
